<compile_context>
chip_gen: v7x
topology: tpu7x:2x2x1
jax: 0.10.0
libtpu: 0.0.40
codegen_flags: <defaults>
</compile_context>

<pallas_src>
import functools
import math
from functools import partial

import jax
import jax.numpy as jnp
from jax.experimental import pallas as pl
from jax.experimental.pallas import tpu as pltpu

NEG_SLOPE = 0.01  # nn.LeakyReLU default negative_slope


# --------------------------------------------------------------------------------------
# Hardware-aware sizing helpers (all static / trace-time Python).
# --------------------------------------------------------------------------------------
@functools.lru_cache(maxsize=None)
def _tpu_budget():
    """Returns (vmem budget for block sizing, explicit scoped-VMEM limit, #TensorCores)."""
    vmem_cap = 64 << 20          # conservative default = v7x per-core VMEM
    cores = 1
    try:
        info = pltpu.get_tpu_info()
        cap = int(getattr(info, "vmem_capacity_bytes", 0) or 0)
        if cap:
            vmem_cap = cap
        for name in ("num_cores", "core_count", "num_tensorcores", "tensorcore_count"):
            v = getattr(info, name, None)
            if v:
                cores = int(v)
                break
    except Exception:
        pass
    if cores == 1:
        try:
            cores = int(getattr(jax.devices()[0], "num_cores", 1) or 1)
        except Exception:
            pass
    budget = min(int(vmem_cap * 0.70), 96 << 20)   # residency budget used to size RB
    limit = min(int(vmem_cap * 0.85), 112 << 20)   # explicit scoped-VMEM limit
    return budget, limit, cores


def _pick_col_chunk(W, Cin, Cout, op_size, prefer_full_width,
                    full_width_weight_cap=1 << 20, full_width_kd_cap=1024,
                    fallback_weight_cap=2 << 20, fallback_col_cap=4096):
    """Number of input columns (JB) folded into each kernel row."""
    def slab_bytes(jb):
        return (jb * Cin) * (4 * jb * Cout) * op_size

    lane_dense = [d for d in range(1, W + 1)
                  if W % d == 0 and (4 * d * Cout) % 128 == 0]

    # NHWC fast path: JB == W makes the output assembly a pure reshape (zero copies),
    # but only when the block-diagonal slab / contraction dim stay small.
    if (prefer_full_width and (4 * W * Cout) % 128 == 0
            and slab_bytes(W) <= full_width_weight_cap and W * Cin <= full_width_kd_cap):
        return W

    if lane_dense:
        return lane_dense[0]     # smallest lane-dense JB: minimal slab & flop inflation

    # No divisor of W yields a multiple-of-128 output row: fall back to the largest chunk
    # under the caps.  Stores become masked (performance cliff, still correct).
    # TODO(synk): for such shapes, padding Cout to a lane-dense value would restore
    # unmasked stores at the cost of a slightly wider output row.
    best = 1
    for d in range(1, W + 1):
        if W % d:
            continue
        if 4 * d * Cout <= fallback_col_cap and slab_bytes(d) <= fallback_weight_cap:
            best = d
    return best


def _choose_row_block(R, kd, nc, op_size, out_size, vmem_budget, cores, force_steps=None):
    """Pick (RB, grid steps, padded row count) against the real VMEM residency."""
    sub = 16  # sublane-aligned for both f32 (8) and bf16 (16) row blocks
    # Residency: double-buffered x block + double-buffered out block + one f32 temp row,
    # plus the (double-buffered) resident weight slab, bias, and slack.
    per_row = 2 * kd * op_size + 2 * nc * out_size + nc * 4
    fixed = 2 * kd * nc * op_size + 2 * nc * 4 + (1 << 20)
    avail = max(vmem_budget - fixed, 2 << 20)
    rb_cap = max(sub, min(int(avail // per_row), 4096))
    rb_cap -= rb_cap % sub

    if force_steps is not None:
        min_steps = int(force_steps)
    elif cores >= 2 and R > 2 * sub:
        min_steps = 2                       # keep both TensorCores busy (v7x)
    else:
        min_steps = 1                       # single-TC chips: don't split what fits

    steps = max(-(-R // rb_cap), min_steps)
    if cores >= 2 and steps > 1 and steps % 2:
        steps += 1                          # even step count balances the two cores

    if steps <= 1:
        return R, 1, R

    # Prefer an exact tiling (no padded rows, no output slice) when one exists nearby.
    for s in range(steps, min(steps + 8, R) + 1):
        if cores >= 2 and s % 2:
            continue
        if R % s == 0 and (R // s) % sub == 0:
            return R // s, s, R

    # Otherwise pad: padded rows only compute bias+activation and are sliced off.
    rb = -(-R // steps)
    rb = -(-rb // sub) * sub
    return rb, steps, rb * steps


# --------------------------------------------------------------------------------------
# The fused kernel: one lane-dense matmul + bias + LeakyReLU/ReLU per row block.
# --------------------------------------------------------------------------------------
def _make_kernel(slope, precision):
    def kernel(x_ref, w_ref, b_ref, o_ref):
        # x_ref: (RB, KD)   w_ref: (KD, NC)   b_ref: (1, NC)   o_ref: (RB, NC)
        y = jnp.dot(x_ref[...], w_ref[...], precision=precision,
                    preferred_element_type=jnp.float32)
        y = y + b_ref[...]
        y = jnp.where(y >= 0, y, slope * y)        # activation fused in f32
        o_ref[...] = y.astype(o_ref.dtype)         # optional narrow (bf16) store
    return kernel


def _deconv_rows(x_nhwc, weight, bias, *, compute_dtype, out_dtype, slope,
                 prefer_full_width, force_steps):
    """Core: NHWC input -> kernel output rows (R, 4*JB*Cout) with columns (kh, jj, kw, co)."""
    N, H, W, Cin = x_nhwc.shape
    Cin_w, Cout, kH, kW = weight.shape
    assert Cin == Cin_w and kH == 2 and kW == 2, "module is fixed to kernel=2, stride=2"

    op_dtype = jnp.dtype(compute_dtype) if compute_dtype is not None else jnp.dtype(x_nhwc.dtype)
    out_dt = jnp.dtype(out_dtype) if out_dtype is not None else jnp.dtype(x_nhwc.dtype)

    JB = _pick_col_chunk(W, Cin, Cout, op_dtype.itemsize, prefer_full_width)
    R = N * H * (W // JB)
    KD = JB * Cin
    NC = 4 * JB * Cout

    # Rows (n, i, jc) x (jj, ci): a pure row-major reshape of NHWC -- no copy.
    x_rows = x_nhwc.reshape(R, KD)

    # Block-diagonal weight slab: wbig[(jj', ci), (kh, jj, kw, co)] = d(jj,jj') W[ci,co,kh,kw].
    w2 = jnp.transpose(weight.astype(jnp.float32), (0, 2, 3, 1))       # (Cin, kh, kw, Cout)
    eye = jnp.eye(JB, dtype=jnp.float32)
    wbig = jnp.einsum("pj,chwd->pchjwd", eye, w2).reshape(KD, NC)
    b_big = jnp.tile(bias.astype(jnp.float32), (4 * JB,)).reshape(1, NC)

    if op_dtype != x_rows.dtype:
        x_rows = x_rows.astype(op_dtype)
    wbig = wbig.astype(op_dtype)

    budget, vmem_limit, cores = _tpu_budget()
    RB, steps, R_pad = _choose_row_block(R, KD, NC, op_dtype.itemsize, out_dt.itemsize,
                                         budget, cores, force_steps)
    if R_pad != R:
        x_rows = jnp.pad(x_rows, ((0, R_pad - R), (0, 0)))

    precision = (jax.lax.Precision.HIGHEST if op_dtype == jnp.float32
                 else jax.lax.Precision.DEFAULT)

    out_rows = pl.pallas_call(
        _make_kernel(slope, precision),
        out_shape=jax.ShapeDtypeStruct((R_pad, NC), out_dt),
        grid_spec=pltpu.PrefetchScalarGridSpec(
            num_scalar_prefetch=0,
            grid=(steps,),
            in_specs=[
                pl.BlockSpec((RB, KD), lambda r: (r, 0)),
                pl.BlockSpec((KD, NC), lambda r: (0, 0)),   # weight slab: resident
                pl.BlockSpec((1, NC), lambda r: (0, 0)),    # bias row: resident
            ],
            out_specs=pl.BlockSpec((RB, NC), lambda r: (r, 0)),
        ),
        compiler_params=pltpu.CompilerParams(
            dimension_semantics=("parallel",),
            vmem_limit_bytes=int(vmem_limit),
        ),
    )(x_rows, wbig, b_big)

    if R_pad != R:
        out_rows = out_rows[:R]
    return out_rows, JB


# --------------------------------------------------------------------------------------
# Public entry points.
# --------------------------------------------------------------------------------------
@partial(jax.jit, static_argnames=("compute_dtype", "out_dtype", "activation", "_force_steps"))
def conv_transpose2d_act(x, weight, bias, *, compute_dtype=None, out_dtype=None,
                         activation="lrelu", _force_steps=None):
    """Module-equivalent forward (NCHW): (N,Cin,H,W) -> (N,Cout,2H,2W), activation fused.

    compute_dtype: optional narrow dtype (e.g. jnp.bfloat16) for the matmul operands.
    out_dtype:     optional narrow dtype for the kernel's stores (halves the dominant
                   output HBM writes when the consumer accepts bf16).
    The two boundary permutes here are pure NCHW-API glue (one XLA pass each).
    """
    # TODO(synk): callers that can keep activations in NHWC should use
    # conv_transpose2d_act_nhwc instead -- it has ZERO boundary copies.
    N, Cin, H, W = x.shape
    Cout = weight.shape[1]
    slope = 0.0 if activation == "relu" else NEG_SLOPE

    x_nhwc = jnp.transpose(x, (0, 2, 3, 1))                       # NCHW -> NHWC (one pass)
    out_rows, JB = _deconv_rows(
        x_nhwc, weight, bias, compute_dtype=compute_dtype, out_dtype=out_dtype,
        slope=slope, prefer_full_width=False, force_steps=_force_steps)

    # Single output permute back to the module's NCHW layout (the 2x2 tap scatter already
    # happened inside the kernel via the (kh, jj, kw, co) column order).
    out = out_rows.reshape(N, H, W // JB, 2, JB, 2, Cout)
    out = jnp.transpose(out, (0, 6, 1, 3, 2, 4, 5))               # (N,Cout,H,kh,W//JB,JB,kw)
    return out.reshape(N, Cout, 2 * H, 2 * W)


@partial(jax.jit, static_argnames=("compute_dtype", "out_dtype", "activation", "_force_steps"))
def conv_transpose2d_act_nhwc(x, weight, bias, *, compute_dtype=None, out_dtype=None,
                              activation="lrelu", _force_steps=None):
    """NHWC fast path: (N,H,W,Cin) -> (N,2H,2W,Cout) with zero boundary copies whenever
    JB == W is chosen (both the row flattening and the output assembly are pure reshapes)."""
    N, H, W, Cin = x.shape
    Cout = weight.shape[1]
    slope = 0.0 if activation == "relu" else NEG_SLOPE

    out_rows, JB = _deconv_rows(
        x, weight, bias, compute_dtype=compute_dtype, out_dtype=out_dtype,
        slope=slope, prefer_full_width=True, force_steps=_force_steps)

    if JB == W:
        # Columns are (kh, j, kw, co): flat order already equals NHWC -> pure reshape.
        return out_rows.reshape(N, 2 * H, 2 * W, Cout)

    out = out_rows.reshape(N, H, W // JB, 2, JB, 2, Cout)
    out = jnp.transpose(out, (0, 1, 3, 2, 4, 5, 6))
    return out.reshape(N, 2 * H, 2 * W, Cout)


# --------------------------------------------------------------------------------------
# Pure-JAX reference and self-test.
# --------------------------------------------------------------------------------------
def _reference(x, weight, bias, slope=NEG_SLOPE):
    N, Cin, H, W = x.shape
    _, Cout, kH, kW = weight.shape
    taps = jnp.einsum("ncij,cdhw->ndihjw", x, weight,
                      precision=jax.lax.Precision.HIGHEST)        # (N, Cout, H, kH, W, kW)
    out = taps.reshape(N, Cout, H * kH, W * kW) + bias[None, :, None, None]
    return jnp.where(out >= 0, out, slope * out)


if __name__ == "__main__":
    # Small shapes consistent with the module's forward (NCHW).
    N, Cin, H, W = 2, 4, 16, 16
    Cout = 8

    key = jax.random.PRNGKey(0)
    kx, kw_, kb = jax.random.split(key, 3)

    x = jax.random.normal(kx, (N, Cin, H, W), dtype=jnp.float32)

    # Deterministic init mimicking PyTorch's default uniform(-k, k), k = 1/sqrt(Cin*kH*kW).
    fan = Cin * 2 * 2
    bound = 1.0 / math.sqrt(fan)
    weight = jax.random.uniform(kw_, (Cin, Cout, 2, 2), jnp.float32, -bound, bound)
    bias = jax.random.uniform(kb, (Cout,), jnp.float32, -bound, bound)

    ref = _reference(x, weight, bias)

    # 1) Module-equivalent NCHW path, f32 (tight check; any layout bug gives O(1) errors).
    out = jax.block_until_ready(conv_transpose2d_act(x, weight, bias))
    assert out.shape == (N, Cout, 2 * H, 2 * W), out.shape
    assert jnp.allclose(out, ref, atol=2e-3, rtol=2e-3), float(jnp.max(jnp.abs(out - ref)))

    # 2) bf16 operands + bf16 output: narrows both the dominant HBM writes and the reads.
    out_bf16 = jax.block_until_ready(conv_transpose2d_act(
        x, weight, bias, compute_dtype=jnp.bfloat16, out_dtype=jnp.bfloat16))
    assert out_bf16.shape == (N, Cout, 2 * H, 2 * W), out_bf16.shape
    assert out_bf16.dtype == jnp.bfloat16
    err = jnp.max(jnp.abs(out_bf16.astype(jnp.float32) - ref))
    assert jnp.allclose(out_bf16.astype(jnp.float32), ref, atol=1e-1, rtol=5e-2), float(err)

    # 3) NHWC fast path (zero boundary copies: both reshapes are row-major views).
    x_nhwc = jnp.transpose(x, (0, 2, 3, 1))
    ref_nhwc = jnp.transpose(ref, (0, 2, 3, 1))
    out_nhwc = jax.block_until_ready(conv_transpose2d_act_nhwc(x_nhwc, weight, bias))
    assert out_nhwc.shape == (N, 2 * H, 2 * W, Cout), out_nhwc.shape
    assert jnp.allclose(out_nhwc, ref_nhwc, atol=2e-3, rtol=2e-3), \
        float(jnp.max(jnp.abs(out_nhwc - ref_nhwc)))

    # 4) Awkward shapes: odd row count with a forced multi-step grid (exercises the padded
    #    rows + output-slice path) and a W where JB < W.
    N2, Cin2, H2, W2, Cout2 = 1, 3, 5, 12, 8
    x2 = jax.random.normal(kx, (N2, Cin2, H2, W2), dtype=jnp.float32)
    w2 = jax.random.uniform(kw_, (Cin2, Cout2, 2, 2), jnp.float32, -bound, bound)
    b2 = jax.random.uniform(kb, (Cout2,), jnp.float32, -bound, bound)
    ref2 = _reference(x2, w2, b2)
    out2 = jax.block_until_ready(conv_transpose2d_act(x2, w2, b2, _force_steps=2))
    assert out2.shape == (N2, Cout2, 2 * H2, 2 * W2), out2.shape
    assert jnp.allclose(out2, ref2, atol=2e-3, rtol=2e-3), \
        float(jnp.max(jnp.abs(out2 - ref2)))

    print("KERNEL_OK")
</pallas_src>

<mosaic_0001>
module attributes {stable_mosaic.version = 11 : i64} {
  func.func @kernel(%arg0: i32, %arg1: memref<128x16xf32, #tpu.memory_space<vmem>>, %arg2: memref<16x128xf32, #tpu.memory_space<vmem>>, %arg3: memref<1x128xf32, #tpu.memory_space<vmem>>, %arg4: memref<128x128xf32, #tpu.memory_space<vmem>>) attributes {dimension_semantics = [#tpu.dimension_semantics<parallel>], iteration_bounds = array<i64: 1>, scalar_prefetch = 0 : i64, scratch_operands = 0 : i64, tpu.core_type = #tpu.core_type<tc>, window_params = [{transform_indices = @transform_0, window_bounds = array<i64: 128, 16>}, {pipeline_mode = #tpu.pipeline_mode<synchronous>, transform_indices = @transform_1, window_bounds = array<i64: 16, 128>}, {pipeline_mode = #tpu.pipeline_mode<synchronous>, transform_indices = @transform_2, window_bounds = array<i64: 1, 128>}, {transform_indices = @transform_3, window_bounds = array<i64: 128, 128>}]} {
    %c0 = arith.constant 0 : index
    %c0_0 = arith.constant 0 : index
    %0 = vector.load %arg1[%c0, %c0_0] : memref<128x16xf32, #tpu.memory_space<vmem>>, vector<128x16xf32>
    %c0_1 = arith.constant 0 : index
    %c0_2 = arith.constant 0 : index
    %1 = vector.load %arg2[%c0_1, %c0_2] : memref<16x128xf32, #tpu.memory_space<vmem>>, vector<16x128xf32>
    %cst = arith.constant dense<0.000000e+00> : vector<128x128xf32>
    %2 = tpu.matmul %0, %1, %cst {dimension_numbers = #tpu.dot_dimension_numbers<[1], [0], [0], [1], [0, 0, 1, 1], [], []>, precision = #tpu.contract_precision<fp32>} : vector<128x16xf32>, vector<16x128xf32>, vector<128x128xf32> -> vector<128x128xf32>
    %c0_3 = arith.constant 0 : index
    %c0_4 = arith.constant 0 : index
    %3 = vector.load %arg3[%c0_3, %c0_4] : memref<1x128xf32, #tpu.memory_space<vmem>>, vector<1x128xf32>
    %4 = vector.broadcast %3 : vector<1x128xf32> to vector<128x128xf32>
    %5 = arith.addf %2, %4 : vector<128x128xf32>
    %cst_5 = arith.constant 0.000000e+00 : f32
    %6 = vector.broadcast %cst_5 : f32 to vector<128x128xf32>
    %7 = arith.cmpf oge, %5, %6 : vector<128x128xf32>
    %cst_6 = arith.constant 0.00999999977 : f32
    %8 = vector.broadcast %cst_6 : f32 to vector<128x128xf32>
    %9 = arith.mulf %8, %5 : vector<128x128xf32>
    %10 = arith.select %7, %5, %9 : vector<128x128xi1>, vector<128x128xf32>
    %c0_7 = arith.constant 0 : index
    %c0_8 = arith.constant 0 : index
    %11 = vector.load %arg4[%c0_7, %c0_8] : memref<128x128xf32, #tpu.memory_space<vmem>>, vector<128x128xf32>
    tpu.vector_store %arg4[%c0_7, %c0_8], %10 {strides = array<i32>} : memref<128x128xf32, #tpu.memory_space<vmem>>, vector<128x128xf32>,
    return
  }
  func.func @transform_0(%arg0: i32) -> (i32, i32) {
    %c0_i32 = arith.constant 0 : i32
    %c0_i32_0 = arith.constant 0 : i32
    return %arg0, %c0_i32 : i32, i32
  }
  func.func @transform_1(%arg0: i32) -> (i32, i32) {
    %c0_i32 = arith.constant 0 : i32
    %c0_i32_0 = arith.constant 0 : i32
    %c0_i32_1 = arith.constant 0 : i32
    return %c0_i32, %c0_i32_0 : i32, i32
  }
  func.func @transform_2(%arg0: i32) -> (i32, i32) {
    %c0_i32 = arith.constant 0 : i32
    %c0_i32_0 = arith.constant 0 : i32
    %c0_i32_1 = arith.constant 0 : i32
    return %c0_i32, %c0_i32_0 : i32, i32
  }
  func.func @transform_3(%arg0: i32) -> (i32, i32) {
    %c0_i32 = arith.constant 0 : i32
    %c0_i32_0 = arith.constant 0 : i32
    return %arg0, %c0_i32 : i32, i32
  }
}

</mosaic_0001>

<llo_original>
// kernel: tile.8
$region0: #{tile.8}
  #allocation0 [shape = 's32[1]{0}', space=sflag, size = 0x4, scoped, tag = 'scoped memory for tile.8']
  %s0 = inlined_call_operand.vmem [shape: f32[8], index: 0, kind: input, shape index: {}]
  %s1 = inlined_call_operand.vmem [shape: f32[16,8], index: 1, kind: output, shape index: {}]
  // Predicated region
  $region2: #{tile.8} parent=0 // pred_check
    _
  $region3: #{tile.8} parent=0 // pred_check_branch
    %3 = sbr.rel (0) target = $region5
  $region4: #{tile.8} parent=0 // pred_region
    _
  $region5: #{tile.8} parent=0 // pred_fallthru
    _
  %v4 = vld [vmem:[%s0] ss:$0 sm:$0xff]
  %5 = vst [vmem:[%s1] sm:$0xff] %v4
  %s6 = scalar_lea.vmem %s1, 8
  %7 = vst [vmem:[%s6] sm:$0xff] %v4

// kernel: tile.9
$region0: #{tile.9}
  %s0 = inlined_call_operand.vmem [shape: f32[16,8], index: 0, kind: input, shape index: {}]
  %s1 = inlined_call_operand.vmem [shape: f32[1,128], index: 1, kind: output, shape index: {}]
  $region1: #{tile.9} parent=0
    #allocation0 [shape = 'u8[4096]{0}', space=vmem, size = 0x1000, scoped, tag = 'scoped mem for output reshape']
    %v2 = vld [vmem:[%s0] sm:$0x1]
    %vm3 = vcmask 64512
    %4 = vst.msk [vmem:[#allocation0] sm:$0x1] %vm3, %v2
    %s5 = scalar_lea.vmem %s0, 15
    %v6 = vld [vmem:[%s5] sm:$0x1]
    %7 = vrot.lane.b32.xlu0 %v6, 120
    %v8 = vpop.permute.xlu0 %7
    %vm9 = vcmask 1048512
    %10 = vst.msk [vmem:[#allocation0] sm:$0x1] %vm9, %v8
    %s11 = scalar_lea.vmem %s0, 14
    %v12 = vld [vmem:[%s11] sm:$0x1]
    %13 = vrot.lane.b32.xlu0 %v12, 112
    %v14 = vpop.permute.xlu0 %13
    %vm15 = vcmask 982912
    %16 = vst.msk [vmem:[#allocation0] sm:$0x1] %vm15, %v14
    %s17 = scalar_lea.vmem %s0, 13
    %v18 = vld [vmem:[%s17] sm:$0x1]
    %19 = vrot.lane.b32.xlu0 %v18, 104
    %v20 = vpop.permute.xlu0 %19
    %vm21 = vcmask 917312
    %22 = vst.msk [vmem:[#allocation0] sm:$0x1] %vm21, %v20
    %s23 = scalar_lea.vmem %s0, 12
    %v24 = vld [vmem:[%s23] sm:$0x1]
    %25 = vrot.lane.b32.xlu0 %v24, 96
    %v26 = vpop.permute.xlu0 %25
    %vm27 = vcmask 851712
    %28 = vst.msk [vmem:[#allocation0] sm:$0x1] %vm27, %v26
    %s29 = scalar_lea.vmem %s0, 11
    %v30 = vld [vmem:[%s29] sm:$0x1]
    %31 = vrot.lane.b32.xlu0 %v30, 88
    %v32 = vpop.permute.xlu0 %31
    %vm33 = vcmask 786112
    %34 = vst.msk [vmem:[#allocation0] sm:$0x1] %vm33, %v32
    %s35 = scalar_lea.vmem %s0, 10
    %v36 = vld [vmem:[%s35] sm:$0x1]
    %37 = vrot.lane.b32.xlu0 %v36, 80
    %v38 = vpop.permute.xlu0 %37
    %vm39 = vcmask 720512
    %40 = vst.msk [vmem:[#allocation0] sm:$0x1] %vm39, %v38
    %s41 = scalar_lea.vmem %s0, 9
    %v42 = vld [vmem:[%s41] sm:$0x1]
    %43 = vrot.lane.b32.xlu0 %v42, 72
    %v44 = vpop.permute.xlu0 %43
    %vm45 = vcmask 654912
    %46 = vst.msk [vmem:[#allocation0] sm:$0x1] %vm45, %v44
    %s47 = scalar_lea.vmem %s0, 8
    %v48 = vld [vmem:[%s47] sm:$0x1]
    %49 = vrot.lane.b32.xlu0 %v48, 64
    %v50 = vpop.permute.xlu0 %49
    %vm51 = vcmask 589312
    %52 = vst.msk [vmem:[#allocation0] sm:$0x1] %vm51, %v50
    %s53 = scalar_lea.vmem %s0, 7
    %v54 = vld [vmem:[%s53] sm:$0x1]
    %55 = vrot.lane.b32.xlu0 %v54, 56
    %v56 = vpop.permute.xlu0 %55
    %vm57 = vcmask 523712
    %58 = vst.msk [vmem:[#allocation0] sm:$0x1] %vm57, %v56
    %s59 = scalar_lea.vmem %s0, 6
    %v60 = vld [vmem:[%s59] sm:$0x1]
    %61 = vrot.lane.b32.xlu0 %v60, 48
    %v62 = vpop.permute.xlu0 %61
    %vm63 = vcmask 458112
    %64 = vst.msk [vmem:[#allocation0] sm:$0x1] %vm63, %v62
    %s65 = scalar_lea.vmem %s0, 5
    %v66 = vld [vmem:[%s65] sm:$0x1]
    %67 = vrot.lane.b32.xlu0 %v66, 40
    %v68 = vpop.permute.xlu0 %67
    %vm69 = vcmask 392512
    %70 = vst.msk [vmem:[#allocation0] sm:$0x1] %vm69, %v68
    %s71 = scalar_lea.vmem %s0, 4
    %v72 = vld [vmem:[%s71] sm:$0x1]
    %73 = vrot.lane.b32.xlu0 %v72, 32
    %v74 = vpop.permute.xlu0 %73
    %vm75 = vcmask 326912
    %76 = vst.msk [vmem:[#allocation0] sm:$0x1] %vm75, %v74
    %s77 = scalar_lea.vmem %s0, 3
    %v78 = vld [vmem:[%s77] sm:$0x1]
    %79 = vrot.lane.b32.xlu0 %v78, 24
    %v80 = vpop.permute.xlu0 %79
    %vm81 = vcmask 261312
    %82 = vst.msk [vmem:[#allocation0] sm:$0x1] %vm81, %v80
    %s83 = scalar_lea.vmem %s0, 2
    %v84 = vld [vmem:[%s83] sm:$0x1]
    %85 = vrot.lane.b32.xlu0 %v84, 16
    %v86 = vpop.permute.xlu0 %85
    %vm87 = vcmask 195712
    %88 = vst.msk [vmem:[#allocation0] sm:$0x1] %vm87, %v86
    %s89 = scalar_lea.vmem %s0, 1
    %v90 = vld [vmem:[%s89] sm:$0x1]
    %91 = vrot.lane.b32.xlu0 %v90, 8
    %v92 = vpop.permute.xlu0 %91
    %vm93 = vcmask 130112
    %94 = vst.msk [vmem:[#allocation0] sm:$0x1] %vm93, %v92
    %s96 = sshllo.u32 0, 1
    %v98 = vld [vmem:[#allocation0] sm:%s96]
    %s99 = sshllo.u32 0, 1
    %100 = vst [vmem:[%s1] sm:%s99] %v98

// kernel: conv_transpose2d_act.1
$region0: #{conv_transpose2d_act.1}
  #allocation0 [shape = 'u32[]', space=smem, size = 0x4, offset = 0x4, fixed_abs, tag = 'smem constant byte address 0x4 - core index']
  #allocation1 [shape = 'u32[144,128]{1,0:T(1,128)}', space=vmem, size = 0x12000, scoped, tag = 'internal scratch']
  %s0 = inlined_call_operand.vmem [shape: f32[128,16], index: 0, kind: input, shape index: {}]
  %s1 = inlined_call_operand.vmem [shape: f32[16,128], index: 1, kind: input, shape index: {}]
  %s2 = inlined_call_operand.vmem [shape: f32[1,128], index: 2, kind: input, shape index: {}]
  %s3 = inlined_call_operand.vmem [shape: f32[128,128], index: 3, kind: output, shape index: {}]
  %s4 = sld [smem:[#allocation0]]
  $region22: #{conv_transpose2d_act.1} parent=0
    _
  %s6 = ssub.s32 1, %s4
  %s7 = scalar_select 0, %s6, %s4
  // Predicated region
  $region2: #{conv_transpose2d_act.1} parent=0 // pred_check
    _
  $region3: #{conv_transpose2d_act.1} parent=0 // pred_check_branch
    %9 = sbr.rel (0) target = $region5
  $region4: #{conv_transpose2d_act.1} parent=0 // pred_region
    _
  $region5: #{conv_transpose2d_act.1} parent=0 // pred_fallthru
    _
  // Predicated region
  $region6: #{conv_transpose2d_act.1} parent=0 // pred_check
    _
  $region7: #{conv_transpose2d_act.1} parent=0 // pred_check_branch
    %11 = sbr.rel (0) target = $region9
  $region8: #{conv_transpose2d_act.1} parent=0 // pred_region
    _
  $region9: #{conv_transpose2d_act.1} parent=0 // pred_fallthru
    _
  // Predicated region
  $region10: #{conv_transpose2d_act.1} parent=0 // pred_check
    _
  $region11: #{conv_transpose2d_act.1} parent=0 // pred_check_branch
    %13 = sbr.rel (0) target = $region13
  $region12: #{conv_transpose2d_act.1} parent=0 // pred_region
    _
  $region13: #{conv_transpose2d_act.1} parent=0 // pred_fallthru
    _
  %v14 = vld [vmem:[%s0] sm:$0xff]
  %v15 = vld [vmem:[%s0 + $0x8] sm:$0xff]
  %v16 = vld [vmem:[%s0 + $0x10] sm:$0xff]
  %v17 = vld [vmem:[%s0 + $0x18] sm:$0xff]
  %v18 = vld [vmem:[%s0 + $0x20] sm:$0xff]
  %v19 = vld [vmem:[%s0 + $0x28] sm:$0xff]
  %v20 = vld [vmem:[%s0 + $0x30] sm:$0xff]
  %v21 = vld [vmem:[%s0 + $0x38] sm:$0xff]
  %v22 = vld [vmem:[%s0 + $0x40] sm:$0xff]
  %v23 = vld [vmem:[%s0 + $0x48] sm:$0xff]
  %v24 = vld [vmem:[%s0 + $0x50] sm:$0xff]
  %v25 = vld [vmem:[%s0 + $0x58] sm:$0xff]
  %v26 = vld [vmem:[%s0 + $0x60] sm:$0xff]
  %v27 = vld [vmem:[%s0 + $0x68] sm:$0xff]
  %v28 = vld [vmem:[%s0 + $0x70] sm:$0xff]
  %v29 = vld [vmem:[%s0 + $0x78] sm:$0xff]
  %v30 = vld [vmem:[%s1] sm:$0xff]
  %v31 = vld [vmem:[%s1 + $0x8] sm:$0xff]
  %v32 = vld [vmem:[%s2] sm:$0x1]
  %v34 = vlaneseq
  %v35 = vshrl.u32 %v34, 7
  %v36 = vsub.s32 0, %v35
  %v37 = vrot.slane %v32, %v36
  %vm39 = vcmask 130048
  %v41 = vsel %vm39, %v14, 0
  %v44 = vsel %vm39, %v15, 0
  %v47 = vsel %vm39, %v16, 0
  %v50 = vsel %vm39, %v17, 0
  %v53 = vsel %vm39, %v18, 0
  %v56 = vsel %vm39, %v19, 0
  %v59 = vsel %vm39, %v20, 0
  %v62 = vsel %vm39, %v21, 0
  %v65 = vsel %vm39, %v22, 0
  %v68 = vsel %vm39, %v23, 0
  %v71 = vsel %vm39, %v24, 0
  %v74 = vsel %vm39, %v25, 0
  %v77 = vsel %vm39, %v26, 0
  %v80 = vsel %vm39, %v27, 0
  %v83 = vsel %vm39, %v28, 0
  %v86 = vsel %vm39, %v29, 0
  %88 = vmatprep.subr.mxu0 0.0
  %v89 = vand.u32 %v30, 4294901760
  %90 = vmatpush1.msra.mxu0 %v89
  %91 = vmatprep.subr.mxu0 0.0
  %v92 = vand.u32 %v31, 4294901760
  %93 = vmatpush1.msra.mxu0 %v92
  %94 = vmatprep.subr.mxu0 0.0
  %95 = vmatpush1.msra.mxu0 0.0
  %96 = vmatprep.subr.mxu0 0.0
  %97 = vmatpush1.msra.mxu0 0.0
  %98 = vmatprep.subr.mxu0 0.0
  %99 = vmatpush1.msra.mxu0 0.0
  %100 = vmatprep.subr.mxu0 0.0
  %101 = vmatpush1.msra.mxu0 0.0
  %102 = vmatprep.subr.mxu0 0.0
  %103 = vmatpush1.msra.mxu0 0.0
  %104 = vmatprep.subr.mxu0 0.0
  %105 = vmatpush1.msra.mxu0 0.0
  %106 = vmatprep.subr.mxu0 0.0
  %107 = vmatpush1.msra.mxu0 0.0
  %108 = vmatprep.subr.mxu0 0.0
  %109 = vmatpush1.msra.mxu0 0.0
  %110 = vmatprep.subr.mxu0 0.0
  %111 = vmatpush1.msra.mxu0 0.0
  %112 = vmatprep.subr.mxu0 0.0
  %113 = vmatpush1.msra.mxu0 0.0
  %114 = vmatprep.subr.mxu0 0.0
  %115 = vmatpush1.msra.mxu0 0.0
  %116 = vmatprep.subr.mxu0 0.0
  %117 = vmatpush1.msra.mxu0 0.0
  %118 = vmatprep.subr.mxu0 0.0
  %119 = vmatpush1.msra.mxu0 0.0
  %120 = vmatprep.subr.mxu0 0.0
  %121 = vmatpush1.msra.mxu0 0.0
  %122 = vmatprep.subr.mxu0 0.0
  %123 = vmatpush1.msra.mxu0 0.0
  %124 = vmatprep.subr.mxu0 0.0
  %125 = vmatpush1.msra.mxu0 0.0
  %126 = vmatprep.subr.mxu0 0.0
  %127 = vmatpush1.msra.mxu0 0.0
  %128 = vmatprep.subr.mxu0 0.0
  %129 = vmatpush1.msra.mxu0 0.0
  %130 = vmatprep.subr.mxu0 0.0
  %131 = vmatpush1.msra.mxu0 0.0
  %132 = vmatprep.subr.mxu0 0.0
  %133 = vmatpush1.msra.mxu0 0.0
  %134 = vmatprep.subr.mxu0 0.0
  %135 = vmatpush1.msra.mxu0 0.0
  %136 = vmatprep.subr.mxu0 0.0
  %137 = vmatpush1.msra.mxu0 0.0
  %138 = vmatprep.subr.mxu0 0.0
  %139 = vmatpush1.msra.mxu0 0.0
  %140 = vmatprep.subr.mxu0 0.0
  %141 = vmatpush1.msra.mxu0 0.0
  %142 = vmatprep.subr.mxu0 0.0
  %143 = vmatpush1.msra.mxu0 0.0
  %144 = vmatprep.subr.mxu0 0.0
  %145 = vmatpush1.msra.mxu0 0.0
  %146 = vmatprep.subr.mxu0 0.0
  %147 = vmatpush1.msra.mxu0 0.0
  %148 = vmatprep.subr.mxu0 0.0
  %149 = vmatpush1.msra.mxu0 0.0
  %150 = vmatprep.subr.mxu0 0.0
  %151 = vmatpush1.msra.mxu0 0.0
  %152 = vmatprep.subr.mxu0 0.0
  %153 = vmatpush1.msra.mxu0 0.0
  %154 = vmatprep.mubr.f32.mxu0 0.0
  %v155 = vand.u32 %v41, 4294901760
  %v156 = vsub.f32 %v41, %v155
  %v157 = vand.u32 %v156, 4294901760
  %v158 = vsub.f32 %v156, %v157
  %v159 = vand.u32 %v158, 4294901760
  %160 = vmatmul.mubr.f32.gmra.mrb[0].mxu0 %v159
  %v161 = vpop.f32.mrb[0].mxu0
  %v162 = vadd.f32 %v37, %v161
  %v163 = vpop.f32.mrb[0].mxu0
  %164 = vmatprep.mubr.f32.mxu0 0.0
  %v165 = vand.u32 %v44, 4294901760
  %v166 = vsub.f32 %v44, %v165
  %v167 = vand.u32 %v166, 4294901760
  %v168 = vsub.f32 %v166, %v167
  %v169 = vand.u32 %v168, 4294901760
  %170 = vmatmul.mubr.f32.gmra.mrb[0].mxu0 %v169
  %v171 = vpop.f32.mrb[0].mxu0
  %v172 = vadd.f32 %v37, %v171
  %v173 = vpop.f32.mrb[0].mxu0
  %174 = vmatprep.mubr.f32.mxu0 0.0
  %v175 = vand.u32 %v47, 4294901760
  %v176 = vsub.f32 %v47, %v175
  %v177 = vand.u32 %v176, 4294901760
  %v178 = vsub.f32 %v176, %v177
  %v179 = vand.u32 %v178, 4294901760
  %180 = vmatmul.mubr.f32.gmra.mrb[0].mxu0 %v179
  %v181 = vpop.f32.mrb[0].mxu0
  %v182 = vadd.f32 %v37, %v181
  %v183 = vpop.f32.mrb[0].mxu0
  %184 = vmatprep.mubr.f32.mxu0 0.0
  %v185 = vand.u32 %v50, 4294901760
  %v186 = vsub.f32 %v50, %v185
  %v187 = vand.u32 %v186, 4294901760
  %v188 = vsub.f32 %v186, %v187
  %v189 = vand.u32 %v188, 4294901760
  %190 = vmatmul.mubr.f32.gmra.mrb[0].mxu0 %v189
  %v191 = vpop.f32.mrb[0].mxu0
  %v192 = vadd.f32 %v37, %v191
  %v193 = vpop.f32.mrb[0].mxu0
  %194 = vmatprep.mubr.f32.mxu0 0.0
  %v195 = vand.u32 %v53, 4294901760
  %v196 = vsub.f32 %v53, %v195
  %v197 = vand.u32 %v196, 4294901760
  %v198 = vsub.f32 %v196, %v197
  %v199 = vand.u32 %v198, 4294901760
  %200 = vmatmul.mubr.f32.gmra.mrb[0].mxu0 %v199
  %v201 = vpop.f32.mrb[0].mxu0
  %v202 = vadd.f32 %v37, %v201
  %v203 = vpop.f32.mrb[0].mxu0
  %204 = vmatprep.mubr.f32.mxu0 0.0
  %v205 = vand.u32 %v56, 4294901760
  %v206 = vsub.f32 %v56, %v205
  %v207 = vand.u32 %v206, 4294901760
  %v208 = vsub.f32 %v206, %v207
  %v209 = vand.u32 %v208, 4294901760
  %210 = vmatmul.mubr.f32.gmra.mrb[0].mxu0 %v209
  %v211 = vpop.f32.mrb[0].mxu0
  %v212 = vadd.f32 %v37, %v211
  %v213 = vpop.f32.mrb[0].mxu0
  %214 = vmatprep.mubr.f32.mxu0 0.0
  %v215 = vand.u32 %v59, 4294901760
  %v216 = vsub.f32 %v59, %v215
  %v217 = vand.u32 %v216, 4294901760
  %v218 = vsub.f32 %v216, %v217
  %v219 = vand.u32 %v218, 4294901760
  %220 = vmatmul.mubr.f32.gmra.mrb[0].mxu0 %v219
  %v221 = vpop.f32.mrb[0].mxu0
  %v222 = vadd.f32 %v37, %v221
  %v223 = vpop.f32.mrb[0].mxu0
  %224 = vmatprep.mubr.f32.mxu0 0.0
  %v225 = vand.u32 %v62, 4294901760
  %v226 = vsub.f32 %v62, %v225
  %v227 = vand.u32 %v226, 4294901760
  %v228 = vsub.f32 %v226, %v227
  %v229 = vand.u32 %v228, 4294901760
  %230 = vmatmul.mubr.f32.gmra.mrb[0].mxu0 %v229
  %v231 = vpop.f32.mrb[0].mxu0
  %v232 = vadd.f32 %v37, %v231
  %v233 = vpop.f32.mrb[0].mxu0
  %234 = vmatprep.mubr.f32.mxu0 0.0
  %v235 = vand.u32 %v65, 4294901760
  %v236 = vsub.f32 %v65, %v235
  %v237 = vand.u32 %v236, 4294901760
  %v238 = vsub.f32 %v236, %v237
  %v239 = vand.u32 %v238, 4294901760
  %240 = vmatmul.mubr.f32.gmra.mrb[0].mxu0 %v239
  %v241 = vpop.f32.mrb[0].mxu0
  %v242 = vadd.f32 %v37, %v241
  %v243 = vpop.f32.mrb[0].mxu0
  %244 = vmatprep.mubr.f32.mxu0 0.0
  %v245 = vand.u32 %v68, 4294901760
  %v246 = vsub.f32 %v68, %v245
  %v247 = vand.u32 %v246, 4294901760
  %v248 = vsub.f32 %v246, %v247
  %v249 = vand.u32 %v248, 4294901760
  %250 = vmatmul.mubr.f32.gmra.mrb[0].mxu0 %v249
  %v251 = vpop.f32.mrb[0].mxu0
  %v252 = vadd.f32 %v37, %v251
  %v253 = vpop.f32.mrb[0].mxu0
  %254 = vmatprep.mubr.f32.mxu0 0.0
  %v255 = vand.u32 %v71, 4294901760
  %v256 = vsub.f32 %v71, %v255
  %v257 = vand.u32 %v256, 4294901760
  %v258 = vsub.f32 %v256, %v257
  %v259 = vand.u32 %v258, 4294901760
  %260 = vmatmul.mubr.f32.gmra.mrb[0].mxu0 %v259
  %v261 = vpop.f32.mrb[0].mxu0
  %v262 = vadd.f32 %v37, %v261
  %v263 = vpop.f32.mrb[0].mxu0
  %264 = vmatprep.mubr.f32.mxu0 0.0
  %v265 = vand.u32 %v74, 4294901760
  %v266 = vsub.f32 %v74, %v265
  %v267 = vand.u32 %v266, 4294901760
  %v268 = vsub.f32 %v266, %v267
  %v269 = vand.u32 %v268, 4294901760
  %270 = vmatmul.mubr.f32.gmra.mrb[0].mxu0 %v269
  %v271 = vpop.f32.mrb[0].mxu0
  %v272 = vadd.f32 %v37, %v271
  %v273 = vpop.f32.mrb[0].mxu0
  %274 = vmatprep.mubr.f32.mxu0 0.0
  %v275 = vand.u32 %v77, 4294901760
  %v276 = vsub.f32 %v77, %v275
  %v277 = vand.u32 %v276, 4294901760
  %v278 = vsub.f32 %v276, %v277
  %v279 = vand.u32 %v278, 4294901760
  %280 = vmatmul.mubr.f32.gmra.mrb[0].mxu0 %v279
  %v281 = vpop.f32.mrb[0].mxu0
  %v282 = vadd.f32 %v37, %v281
  %v283 = vpop.f32.mrb[0].mxu0
  %284 = vmatprep.mubr.f32.mxu0 0.0
  %v285 = vand.u32 %v80, 4294901760
  %v286 = vsub.f32 %v80, %v285
  %v287 = vand.u32 %v286, 4294901760
  %v288 = vsub.f32 %v286, %v287
  %v289 = vand.u32 %v288, 4294901760
  %290 = vmatmul.mubr.f32.gmra.mrb[0].mxu0 %v289
  %v291 = vpop.f32.mrb[0].mxu0
  %v292 = vadd.f32 %v37, %v291
  %v293 = vpop.f32.mrb[0].mxu0
  %294 = vmatprep.mubr.f32.mxu0 0.0
  %v295 = vand.u32 %v83, 4294901760
  %v296 = vsub.f32 %v83, %v295
  %v297 = vand.u32 %v296, 4294901760
  %v298 = vsub.f32 %v296, %v297
  %v299 = vand.u32 %v298, 4294901760
  %300 = vmatmul.mubr.f32.gmra.mrb[0].mxu0 %v299
  %v301 = vpop.f32.mrb[0].mxu0
  %v302 = vadd.f32 %v37, %v301
  %v303 = vpop.f32.mrb[0].mxu0
  %304 = vmatprep.mubr.f32.mxu0 0.0
  %v305 = vand.u32 %v86, 4294901760
  %v306 = vsub.f32 %v86, %v305
  %v307 = vand.u32 %v306, 4294901760
  %v308 = vsub.f32 %v306, %v307
  %v309 = vand.u32 %v308, 4294901760
  %310 = vmatmul.mubr.f32.gmra.mrb[0].mxu0 %v309
  %v311 = vpop.f32.mrb[0].mxu0
  %v312 = vadd.f32 %v37, %v311
  %v313 = vpop.f32.mrb[0].mxu0
  %314 = vdwg.mxu0
  %315 = vmatprep.subr.mxu0 0.0
  %v316 = vand.u32 %v30, 4294901760
  %v317 = vsub.f32 %v30, %v316
  %v318 = vand.u32 %v317, 4294901760
  %v319 = vsub.f32 %v317, %v318
  %v320 = vand.u32 %v319, 4294901760
  %321 = vmatpush1.msra.mxu0 %v320
  %322 = vmatprep.subr.mxu0 0.0
  %v323 = vand.u32 %v31, 4294901760
  %v324 = vsub.f32 %v31, %v323
  %v325 = vand.u32 %v324, 4294901760
  %v326 = vsub.f32 %v324, %v325
  %v327 = vand.u32 %v326, 4294901760
  %328 = vmatpush1.msra.mxu0 %v327
  %329 = vmatprep.subr.mxu0 0.0
  %330 = vmatpush1.msra.mxu0 0.0
  %331 = vmatprep.subr.mxu0 0.0
  %332 = vmatpush1.msra.mxu0 0.0
  %333 = vmatprep.subr.mxu0 0.0
  %334 = vmatpush1.msra.mxu0 0.0
  %335 = vmatprep.subr.mxu0 0.0
  %336 = vmatpush1.msra.mxu0 0.0
  %337 = vmatprep.subr.mxu0 0.0
  %338 = vmatpush1.msra.mxu0 0.0
  %339 = vmatprep.subr.mxu0 0.0
  %340 = vmatpush1.msra.mxu0 0.0
  %341 = vmatprep.subr.mxu0 0.0
  %342 = vmatpush1.msra.mxu0 0.0
  %343 = vmatprep.subr.mxu0 0.0
  %344 = vmatpush1.msra.mxu0 0.0
  %345 = vmatprep.subr.mxu0 0.0
  %346 = vmatpush1.msra.mxu0 0.0
  %347 = vmatprep.subr.mxu0 0.0
  %348 = vmatpush1.msra.mxu0 0.0
  %349 = vmatprep.subr.mxu0 0.0
  %350 = vmatpush1.msra.mxu0 0.0
  %351 = vmatprep.subr.mxu0 0.0
  %352 = vmatpush1.msra.mxu0 0.0
  %353 = vmatprep.subr.mxu0 0.0
  %354 = vmatpush1.msra.mxu0 0.0
  %355 = vmatprep.subr.mxu0 0.0
  %356 = vmatpush1.msra.mxu0 0.0
  %357 = vmatprep.subr.mxu0 0.0
  %358 = vmatpush1.msra.mxu0 0.0
  %359 = vmatprep.subr.mxu0 0.0
  %360 = vmatpush1.msra.mxu0 0.0
  %361 = vmatprep.subr.mxu0 0.0
  %362 = vmatpush1.msra.mxu0 0.0
  %363 = vmatprep.subr.mxu0 0.0
  %364 = vmatpush1.msra.mxu0 0.0
  %365 = vmatprep.subr.mxu0 0.0
  %366 = vmatpush1.msra.mxu0 0.0
  %367 = vmatprep.subr.mxu0 0.0
  %368 = vmatpush1.msra.mxu0 0.0
  %369 = vmatprep.subr.mxu0 0.0
  %370 = vmatpush1.msra.mxu0 0.0
  %371 = vmatprep.subr.mxu0 0.0
  %372 = vmatpush1.msra.mxu0 0.0
  %373 = vmatprep.subr.mxu0 0.0
  %374 = vmatpush1.msra.mxu0 0.0
  %375 = vmatprep.subr.mxu0 0.0
  %376 = vmatpush1.msra.mxu0 0.0
  %377 = vmatprep.subr.mxu0 0.0
  %378 = vmatpush1.msra.mxu0 0.0
  %379 = vmatprep.subr.mxu0 0.0
  %380 = vmatpush1.msra.mxu0 0.0
  %381 = vmatprep.subr.mxu0 0.0
  %382 = vmatpush1.msra.mxu0 0.0
  %383 = vmatprep.subr.mxu0 0.0
  %384 = vmatpush1.msra.mxu0 0.0
  %385 = vmatprep.subr.mxu0 0.0
  %386 = vmatpush1.msra.mxu0 0.0
  %387 = vmatprep.subr.mxu0 0.0
  %388 = vmatpush1.msra.mxu0 0.0
  %389 = vmatprep.mubr.f32.mxu0 0.0
  %v390 = vand.u32 %v41, 4294901760
  %391 = vmatmul.mubr.f32.gmra.mrb[0].mxu0 %v390
  %v392 = vpop.f32.mrb[0].mxu0
  %v393 = vadd.f32 %v162, %v392
  %v394 = vpop.f32.mrb[0].mxu0
  %395 = vmatprep.mubr.f32.mxu0 0.0
  %v396 = vand.u32 %v44, 4294901760
  %397 = vmatmul.mubr.f32.gmra.mrb[0].mxu0 %v396
  %v398 = vpop.f32.mrb[0].mxu0
  %v399 = vadd.f32 %v172, %v398
  %v400 = vpop.f32.mrb[0].mxu0
  %401 = vmatprep.mubr.f32.mxu0 0.0
  %v402 = vand.u32 %v47, 4294901760
  %403 = vmatmul.mubr.f32.gmra.mrb[0].mxu0 %v402
  %v404 = vpop.f32.mrb[0].mxu0
  %v405 = vadd.f32 %v182, %v404
  %v406 = vpop.f32.mrb[0].mxu0
  %407 = vmatprep.mubr.f32.mxu0 0.0
  %v408 = vand.u32 %v50, 4294901760
  %409 = vmatmul.mubr.f32.gmra.mrb[0].mxu0 %v408
  %v410 = vpop.f32.mrb[0].mxu0
  %v411 = vadd.f32 %v192, %v410
  %v412 = vpop.f32.mrb[0].mxu0
  %413 = vmatprep.mubr.f32.mxu0 0.0
  %v414 = vand.u32 %v53, 4294901760
  %415 = vmatmul.mubr.f32.gmra.mrb[0].mxu0 %v414
  %v416 = vpop.f32.mrb[0].mxu0
  %v417 = vadd.f32 %v202, %v416
  %v418 = vpop.f32.mrb[0].mxu0
  %419 = vmatprep.mubr.f32.mxu0 0.0
  %v420 = vand.u32 %v56, 4294901760
  %421 = vmatmul.mubr.f32.gmra.mrb[0].mxu0 %v420
  %v422 = vpop.f32.mrb[0].mxu0
  %v423 = vadd.f32 %v212, %v422
  %v424 = vpop.f32.mrb[0].mxu0
  %425 = vmatprep.mubr.f32.mxu0 0.0
  %v426 = vand.u32 %v59, 4294901760
  %427 = vmatmul.mubr.f32.gmra.mrb[0].mxu0 %v426
  %v428 = vpop.f32.mrb[0].mxu0
  %v429 = vadd.f32 %v222, %v428
  %v430 = vpop.f32.mrb[0].mxu0
  %431 = vmatprep.mubr.f32.mxu0 0.0
  %v432 = vand.u32 %v62, 4294901760
  %433 = vmatmul.mubr.f32.gmra.mrb[0].mxu0 %v432
  %v434 = vpop.f32.mrb[0].mxu0
  %v435 = vadd.f32 %v232, %v434
  %v436 = vpop.f32.mrb[0].mxu0
  %437 = vmatprep.mubr.f32.mxu0 0.0
  %v438 = vand.u32 %v65, 4294901760
  %439 = vmatmul.mubr.f32.gmra.mrb[0].mxu0 %v438
  %v440 = vpop.f32.mrb[0].mxu0
  %v441 = vadd.f32 %v242, %v440
  %v442 = vpop.f32.mrb[0].mxu0
  %443 = vmatprep.mubr.f32.mxu0 0.0
  %v444 = vand.u32 %v68, 4294901760
  %445 = vmatmul.mubr.f32.gmra.mrb[0].mxu0 %v444
  %v446 = vpop.f32.mrb[0].mxu0
  %v447 = vadd.f32 %v252, %v446
  %v448 = vpop.f32.mrb[0].mxu0
  %449 = vmatprep.mubr.f32.mxu0 0.0
  %v450 = vand.u32 %v71, 4294901760
  %451 = vmatmul.mubr.f32.gmra.mrb[0].mxu0 %v450
  %v452 = vpop.f32.mrb[0].mxu0
  %v453 = vadd.f32 %v262, %v452
  %v454 = vpop.f32.mrb[0].mxu0
  %455 = vmatprep.mubr.f32.mxu0 0.0
  %v456 = vand.u32 %v74, 4294901760
  %457 = vmatmul.mubr.f32.gmra.mrb[0].mxu0 %v456
  %v458 = vpop.f32.mrb[0].mxu0
  %v459 = vadd.f32 %v272, %v458
  %v460 = vpop.f32.mrb[0].mxu0
  %461 = vmatprep.mubr.f32.mxu0 0.0
  %v462 = vand.u32 %v77, 4294901760
  %463 = vmatmul.mubr.f32.gmra.mrb[0].mxu0 %v462
  %v464 = vpop.f32.mrb[0].mxu0
  %v465 = vadd.f32 %v282, %v464
  %v466 = vpop.f32.mrb[0].mxu0
  %467 = vmatprep.mubr.f32.mxu0 0.0
  %v468 = vand.u32 %v80, 4294901760
  %469 = vmatmul.mubr.f32.gmra.mrb[0].mxu0 %v468
  %v470 = vpop.f32.mrb[0].mxu0
  %v471 = vadd.f32 %v292, %v470
  %v472 = vpop.f32.mrb[0].mxu0
  %473 = vmatprep.mubr.f32.mxu0 0.0
  %v474 = vand.u32 %v83, 4294901760
  %475 = vmatmul.mubr.f32.gmra.mrb[0].mxu0 %v474
  %v476 = vpop.f32.mrb[0].mxu0
  %v477 = vadd.f32 %v302, %v476
  %v478 = vpop.f32.mrb[0].mxu0
  %479 = vmatprep.mubr.f32.mxu0 0.0
  %v480 = vand.u32 %v86, 4294901760
  %481 = vmatmul.mubr.f32.gmra.mrb[0].mxu0 %v480
  %v482 = vpop.f32.mrb[0].mxu0
  %v483 = vadd.f32 %v312, %v482
  %v484 = vpop.f32.mrb[0].mxu0
  %485 = vdwg.mxu0
  %486 = vmatprep.subr.mxu0 0.0
  %v487 = vand.u32 %v30, 4294901760
  %v488 = vsub.f32 %v30, %v487
  %489 = vmatpush1.msra.mxu0 %v488
  %490 = vmatprep.subr.mxu0 0.0
  %v491 = vand.u32 %v31, 4294901760
  %v492 = vsub.f32 %v31, %v491
  %493 = vmatpush1.msra.mxu0 %v492
  %494 = vmatprep.subr.mxu0 0.0
  %495 = vmatpush1.msra.mxu0 0.0
  %496 = vmatprep.subr.mxu0 0.0
  %497 = vmatpush1.msra.mxu0 0.0
  %498 = vmatprep.subr.mxu0 0.0
  %499 = vmatpush1.msra.mxu0 0.0
  %500 = vmatprep.subr.mxu0 0.0
  %501 = vmatpush1.msra.mxu0 0.0
  %502 = vmatprep.subr.mxu0 0.0
  %503 = vmatpush1.msra.mxu0 0.0
  %504 = vmatprep.subr.mxu0 0.0
  %505 = vmatpush1.msra.mxu0 0.0
  %506 = vmatprep.subr.mxu0 0.0
  %507 = vmatpush1.msra.mxu0 0.0
  %508 = vmatprep.subr.mxu0 0.0
  %509 = vmatpush1.msra.mxu0 0.0
  %510 = vmatprep.subr.mxu0 0.0
  %511 = vmatpush1.msra.mxu0 0.0
  %512 = vmatprep.subr.mxu0 0.0
  %513 = vmatpush1.msra.mxu0 0.0
  %514 = vmatprep.subr.mxu0 0.0
  %515 = vmatpush1.msra.mxu0 0.0
  %516 = vmatprep.subr.mxu0 0.0
  %517 = vmatpush1.msra.mxu0 0.0
  %518 = vmatprep.subr.mxu0 0.0
  %519 = vmatpush1.msra.mxu0 0.0
  %520 = vmatprep.subr.mxu0 0.0
  %521 = vmatpush1.msra.mxu0 0.0
  %522 = vmatprep.subr.mxu0 0.0
  %523 = vmatpush1.msra.mxu0 0.0
  %524 = vmatprep.subr.mxu0 0.0
  %525 = vmatpush1.msra.mxu0 0.0
  %526 = vmatprep.subr.mxu0 0.0
  %527 = vmatpush1.msra.mxu0 0.0
  %528 = vmatprep.subr.mxu0 0.0
  %529 = vmatpush1.msra.mxu0 0.0
  %530 = vmatprep.subr.mxu0 0.0
  %531 = vmatpush1.msra.mxu0 0.0
  %532 = vmatprep.subr.mxu0 0.0
  %533 = vmatpush1.msra.mxu0 0.0
  %534 = vmatprep.subr.mxu0 0.0
  %535 = vmatpush1.msra.mxu0 0.0
  %536 = vmatprep.subr.mxu0 0.0
  %537 = vmatpush1.msra.mxu0 0.0
  %538 = vmatprep.subr.mxu0 0.0
  %539 = vmatpush1.msra.mxu0 0.0
  %540 = vmatprep.subr.mxu0 0.0
  %541 = vmatpush1.msra.mxu0 0.0
  %542 = vmatprep.subr.mxu0 0.0
  %543 = vmatpush1.msra.mxu0 0.0
  %544 = vmatprep.subr.mxu0 0.0
  %545 = vmatpush1.msra.mxu0 0.0
  %546 = vmatprep.subr.mxu0 0.0
  %547 = vmatpush1.msra.mxu0 0.0
  %548 = vmatprep.subr.mxu0 0.0
  %549 = vmatpush1.msra.mxu0 0.0
  %550 = vmatprep.subr.mxu0 0.0
  %551 = vmatpush1.msra.mxu0 0.0
  %552 = vmatprep.subr.mxu0 0.0
  %553 = vmatpush1.msra.mxu0 0.0
  %554 = vmatprep.mubr.f32.mxu0 0.0
  %v555 = vand.u32 %v41, 4294901760
  %v556 = vsub.f32 %v41, %v555
  %557 = vmatmul.mubr.f32.gmra.mrb[0].mxu0 %v556
  %v558 = vpop.f32.mrb[0].mxu0
  %v559 = vadd.f32 %v393, %v558
  %v560 = vpop.f32.mrb[0].mxu0
  %561 = vmatprep.mubr.f32.mxu0 0.0
  %v562 = vand.u32 %v44, 4294901760
  %v563 = vsub.f32 %v44, %v562
  %564 = vmatmul.mubr.f32.gmra.mrb[0].mxu0 %v563
  %v565 = vpop.f32.mrb[0].mxu0
  %v566 = vadd.f32 %v399, %v565
  %v567 = vpop.f32.mrb[0].mxu0
  %568 = vmatprep.mubr.f32.mxu0 0.0
  %v569 = vand.u32 %v47, 4294901760
  %v570 = vsub.f32 %v47, %v569
  %571 = vmatmul.mubr.f32.gmra.mrb[0].mxu0 %v570
  %v572 = vpop.f32.mrb[0].mxu0
  %v573 = vadd.f32 %v405, %v572
  %v574 = vpop.f32.mrb[0].mxu0
  %575 = vmatprep.mubr.f32.mxu0 0.0
  %v576 = vand.u32 %v50, 4294901760
  %v577 = vsub.f32 %v50, %v576
  %578 = vmatmul.mubr.f32.gmra.mrb[0].mxu0 %v577
  %v579 = vpop.f32.mrb[0].mxu0
  %v580 = vadd.f32 %v411, %v579
  %v581 = vpop.f32.mrb[0].mxu0
  %582 = vmatprep.mubr.f32.mxu0 0.0
  %v583 = vand.u32 %v53, 4294901760
  %v584 = vsub.f32 %v53, %v583
  %585 = vmatmul.mubr.f32.gmra.mrb[0].mxu0 %v584
  %v586 = vpop.f32.mrb[0].mxu0
  %v587 = vadd.f32 %v417, %v586
  %v588 = vpop.f32.mrb[0].mxu0
  %589 = vmatprep.mubr.f32.mxu0 0.0
  %v590 = vand.u32 %v56, 4294901760
  %v591 = vsub.f32 %v56, %v590
  %592 = vmatmul.mubr.f32.gmra.mrb[0].mxu0 %v591
  %v593 = vpop.f32.mrb[0].mxu0
  %v594 = vadd.f32 %v423, %v593
  %v595 = vpop.f32.mrb[0].mxu0
  %596 = vmatprep.mubr.f32.mxu0 0.0
  %v597 = vand.u32 %v59, 4294901760
  %v598 = vsub.f32 %v59, %v597
  %599 = vmatmul.mubr.f32.gmra.mrb[0].mxu0 %v598
  %v600 = vpop.f32.mrb[0].mxu0
  %v601 = vadd.f32 %v429, %v600
  %v602 = vpop.f32.mrb[0].mxu0
  %603 = vmatprep.mubr.f32.mxu0 0.0
  %v604 = vand.u32 %v62, 4294901760
  %v605 = vsub.f32 %v62, %v604
  %606 = vmatmul.mubr.f32.gmra.mrb[0].mxu0 %v605
  %v607 = vpop.f32.mrb[0].mxu0
  %v608 = vadd.f32 %v435, %v607
  %v609 = vpop.f32.mrb[0].mxu0
  %610 = vmatprep.mubr.f32.mxu0 0.0
  %v611 = vand.u32 %v65, 4294901760
  %v612 = vsub.f32 %v65, %v611
  %613 = vmatmul.mubr.f32.gmra.mrb[0].mxu0 %v612
  %v614 = vpop.f32.mrb[0].mxu0
  %v615 = vadd.f32 %v441, %v614
  %v616 = vpop.f32.mrb[0].mxu0
  %617 = vmatprep.mubr.f32.mxu0 0.0
  %v618 = vand.u32 %v68, 4294901760
  %v619 = vsub.f32 %v68, %v618
  %620 = vmatmul.mubr.f32.gmra.mrb[0].mxu0 %v619
  %v621 = vpop.f32.mrb[0].mxu0
  %v622 = vadd.f32 %v447, %v621
  %v623 = vpop.f32.mrb[0].mxu0
  %624 = vmatprep.mubr.f32.mxu0 0.0
  %v625 = vand.u32 %v71, 4294901760
  %v626 = vsub.f32 %v71, %v625
  %627 = vmatmul.mubr.f32.gmra.mrb[0].mxu0 %v626
  %v628 = vpop.f32.mrb[0].mxu0
  %v629 = vadd.f32 %v453, %v628
  %v630 = vpop.f32.mrb[0].mxu0
  %631 = vmatprep.mubr.f32.mxu0 0.0
  %v632 = vand.u32 %v74, 4294901760
  %v633 = vsub.f32 %v74, %v632
  %634 = vmatmul.mubr.f32.gmra.mrb[0].mxu0 %v633
  %v635 = vpop.f32.mrb[0].mxu0
  %v636 = vadd.f32 %v459, %v635
  %v637 = vpop.f32.mrb[0].mxu0
  %638 = vmatprep.mubr.f32.mxu0 0.0
  %v639 = vand.u32 %v77, 4294901760
  %v640 = vsub.f32 %v77, %v639
  %641 = vmatmul.mubr.f32.gmra.mrb[0].mxu0 %v640
  %v642 = vpop.f32.mrb[0].mxu0
  %v643 = vadd.f32 %v465, %v642
  %v644 = vpop.f32.mrb[0].mxu0
  %645 = vmatprep.mubr.f32.mxu0 0.0
  %v646 = vand.u32 %v80, 4294901760
  %v647 = vsub.f32 %v80, %v646
  %648 = vmatmul.mubr.f32.gmra.mrb[0].mxu0 %v647
  %v649 = vpop.f32.mrb[0].mxu0
  %v650 = vadd.f32 %v471, %v649
  %v651 = vpop.f32.mrb[0].mxu0
  %652 = vmatprep.mubr.f32.mxu0 0.0
  %v653 = vand.u32 %v83, 4294901760
  %v654 = vsub.f32 %v83, %v653
  %655 = vmatmul.mubr.f32.gmra.mrb[0].mxu0 %v654
  %v656 = vpop.f32.mrb[0].mxu0
  %v657 = vadd.f32 %v477, %v656
  %v658 = vpop.f32.mrb[0].mxu0
  %659 = vmatprep.mubr.f32.mxu0 0.0
  %v660 = vand.u32 %v86, 4294901760
  %v661 = vsub.f32 %v86, %v660
  %662 = vmatmul.mubr.f32.gmra.mrb[0].mxu0 %v661
  %v663 = vpop.f32.mrb[0].mxu0
  %v664 = vadd.f32 %v483, %v663
  %v665 = vpop.f32.mrb[0].mxu0
  %666 = vdwg.mxu0
  %667 = vmatprep.subr.mxu0 0.0
  %v668 = vand.u32 %v30, 4294901760
  %669 = vmatpush1.msra.mxu0 %v668
  %670 = vmatprep.subr.mxu0 0.0
  %v671 = vand.u32 %v31, 4294901760
  %672 = vmatpush1.msra.mxu0 %v671
  %673 = vmatprep.subr.mxu0 0.0
  %674 = vmatpush1.msra.mxu0 0.0
  %675 = vmatprep.subr.mxu0 0.0
  %676 = vmatpush1.msra.mxu0 0.0
  %677 = vmatprep.subr.mxu0 0.0
  %678 = vmatpush1.msra.mxu0 0.0
  %679 = vmatprep.subr.mxu0 0.0
  %680 = vmatpush1.msra.mxu0 0.0
  %681 = vmatprep.subr.mxu0 0.0
  %682 = vmatpush1.msra.mxu0 0.0
  %683 = vmatprep.subr.mxu0 0.0
  %684 = vmatpush1.msra.mxu0 0.0
  %685 = vmatprep.subr.mxu0 0.0
  %686 = vmatpush1.msra.mxu0 0.0
  %687 = vmatprep.subr.mxu0 0.0
  %688 = vmatpush1.msra.mxu0 0.0
  %689 = vmatprep.subr.mxu0 0.0
  %690 = vmatpush1.msra.mxu0 0.0
  %691 = vmatprep.subr.mxu0 0.0
  %692 = vmatpush1.msra.mxu0 0.0
  %693 = vmatprep.subr.mxu0 0.0
  %694 = vmatpush1.msra.mxu0 0.0
  %695 = vmatprep.subr.mxu0 0.0
  %696 = vmatpush1.msra.mxu0 0.0
  %697 = vmatprep.subr.mxu0 0.0
  %698 = vmatpush1.msra.mxu0 0.0
  %699 = vmatprep.subr.mxu0 0.0
  %700 = vmatpush1.msra.mxu0 0.0
  %701 = vmatprep.subr.mxu0 0.0
  %702 = vmatpush1.msra.mxu0 0.0
  %703 = vmatprep.subr.mxu0 0.0
  %704 = vmatpush1.msra.mxu0 0.0
  %705 = vmatprep.subr.mxu0 0.0
  %706 = vmatpush1.msra.mxu0 0.0
  %707 = vmatprep.subr.mxu0 0.0
  %708 = vmatpush1.msra.mxu0 0.0
  %709 = vmatprep.subr.mxu0 0.0
  %710 = vmatpush1.msra.mxu0 0.0
  %711 = vmatprep.subr.mxu0 0.0
  %712 = vmatpush1.msra.mxu0 0.0
  %713 = vmatprep.subr.mxu0 0.0
  %714 = vmatpush1.msra.mxu0 0.0
  %715 = vmatprep.subr.mxu0 0.0
  %716 = vmatpush1.msra.mxu0 0.0
  %717 = vmatprep.subr.mxu0 0.0
  %718 = vmatpush1.msra.mxu0 0.0
  %719 = vmatprep.subr.mxu0 0.0
  %720 = vmatpush1.msra.mxu0 0.0
  %721 = vmatprep.subr.mxu0 0.0
  %722 = vmatpush1.msra.mxu0 0.0
  %723 = vmatprep.subr.mxu0 0.0
  %724 = vmatpush1.msra.mxu0 0.0
  %725 = vmatprep.subr.mxu0 0.0
  %726 = vmatpush1.msra.mxu0 0.0
  %727 = vmatprep.subr.mxu0 0.0
  %728 = vmatpush1.msra.mxu0 0.0
  %729 = vmatprep.subr.mxu0 0.0
  %730 = vmatpush1.msra.mxu0 0.0
  %731 = vmatprep.subr.mxu0 0.0
  %732 = vmatpush1.msra.mxu0 0.0
  %733 = vmatprep.mubr.f32.mxu0 0.0
  %v734 = vand.u32 %v41, 4294901760
  %v735 = vsub.f32 %v41, %v734
  %v736 = vand.u32 %v735, 4294901760
  %737 = vmatmul.mubr.f32.gmra.mrb[0].mxu0 %v736
  %v738 = vpop.f32.mrb[0].mxu0
  %v739 = vadd.f32 %v559, %v738
  %v740 = vpop.f32.mrb[0].mxu0
  %741 = vmatprep.mubr.f32.mxu0 0.0
  %v742 = vand.u32 %v44, 4294901760
  %v743 = vsub.f32 %v44, %v742
  %v744 = vand.u32 %v743, 4294901760
  %745 = vmatmul.mubr.f32.gmra.mrb[0].mxu0 %v744
  %v746 = vpop.f32.mrb[0].mxu0
  %v747 = vadd.f32 %v566, %v746
  %v748 = vpop.f32.mrb[0].mxu0
  %749 = vmatprep.mubr.f32.mxu0 0.0
  %v750 = vand.u32 %v47, 4294901760
  %v751 = vsub.f32 %v47, %v750
  %v752 = vand.u32 %v751, 4294901760
  %753 = vmatmul.mubr.f32.gmra.mrb[0].mxu0 %v752
  %v754 = vpop.f32.mrb[0].mxu0
  %v755 = vadd.f32 %v573, %v754
  %v756 = vpop.f32.mrb[0].mxu0
  %757 = vmatprep.mubr.f32.mxu0 0.0
  %v758 = vand.u32 %v50, 4294901760
  %v759 = vsub.f32 %v50, %v758
  %v760 = vand.u32 %v759, 4294901760
  %761 = vmatmul.mubr.f32.gmra.mrb[0].mxu0 %v760
  %v762 = vpop.f32.mrb[0].mxu0
  %v763 = vadd.f32 %v580, %v762
  %v764 = vpop.f32.mrb[0].mxu0
  %765 = vmatprep.mubr.f32.mxu0 0.0
  %v766 = vand.u32 %v53, 4294901760
  %v767 = vsub.f32 %v53, %v766
  %v768 = vand.u32 %v767, 4294901760
  %769 = vmatmul.mubr.f32.gmra.mrb[0].mxu0 %v768
  %v770 = vpop.f32.mrb[0].mxu0
  %v771 = vadd.f32 %v587, %v770
  %v772 = vpop.f32.mrb[0].mxu0
  %773 = vmatprep.mubr.f32.mxu0 0.0
  %v774 = vand.u32 %v56, 4294901760
  %v775 = vsub.f32 %v56, %v774
  %v776 = vand.u32 %v775, 4294901760
  %777 = vmatmul.mubr.f32.gmra.mrb[0].mxu0 %v776
  %v778 = vpop.f32.mrb[0].mxu0
  %v779 = vadd.f32 %v594, %v778
  %v780 = vpop.f32.mrb[0].mxu0
  %781 = vmatprep.mubr.f32.mxu0 0.0
  %v782 = vand.u32 %v59, 4294901760
  %v783 = vsub.f32 %v59, %v782
  %v784 = vand.u32 %v783, 4294901760
  %785 = vmatmul.mubr.f32.gmra.mrb[0].mxu0 %v784
  %v786 = vpop.f32.mrb[0].mxu0
  %v787 = vadd.f32 %v601, %v786
  %v788 = vpop.f32.mrb[0].mxu0
  %789 = vmatprep.mubr.f32.mxu0 0.0
  %v790 = vand.u32 %v62, 4294901760
  %v791 = vsub.f32 %v62, %v790
  %v792 = vand.u32 %v791, 4294901760
  %793 = vmatmul.mubr.f32.gmra.mrb[0].mxu0 %v792
  %v794 = vpop.f32.mrb[0].mxu0
  %v795 = vadd.f32 %v608, %v794
  %v796 = vpop.f32.mrb[0].mxu0
  %797 = vmatprep.mubr.f32.mxu0 0.0
  %v798 = vand.u32 %v65, 4294901760
  %v799 = vsub.f32 %v65, %v798
  %v800 = vand.u32 %v799, 4294901760
  %801 = vmatmul.mubr.f32.gmra.mrb[0].mxu0 %v800
  %v802 = vpop.f32.mrb[0].mxu0
  %v803 = vadd.f32 %v615, %v802
  %v804 = vpop.f32.mrb[0].mxu0
  %805 = vmatprep.mubr.f32.mxu0 0.0
  %v806 = vand.u32 %v68, 4294901760
  %v807 = vsub.f32 %v68, %v806
  %v808 = vand.u32 %v807, 4294901760
  %809 = vmatmul.mubr.f32.gmra.mrb[0].mxu0 %v808
  %v810 = vpop.f32.mrb[0].mxu0
  %v811 = vadd.f32 %v622, %v810
  %v812 = vpop.f32.mrb[0].mxu0
  %813 = vmatprep.mubr.f32.mxu0 0.0
  %v814 = vand.u32 %v71, 4294901760
  %v815 = vsub.f32 %v71, %v814
  %v816 = vand.u32 %v815, 4294901760
  %817 = vmatmul.mubr.f32.gmra.mrb[0].mxu0 %v816
  %v818 = vpop.f32.mrb[0].mxu0
  %v819 = vadd.f32 %v629, %v818
  %v820 = vpop.f32.mrb[0].mxu0
  %821 = vmatprep.mubr.f32.mxu0 0.0
  %v822 = vand.u32 %v74, 4294901760
  %v823 = vsub.f32 %v74, %v822
  %v824 = vand.u32 %v823, 4294901760
  %825 = vmatmul.mubr.f32.gmra.mrb[0].mxu0 %v824
  %v826 = vpop.f32.mrb[0].mxu0
  %v827 = vadd.f32 %v636, %v826
  %v828 = vpop.f32.mrb[0].mxu0
  %829 = vmatprep.mubr.f32.mxu0 0.0
  %v830 = vand.u32 %v77, 4294901760
  %v831 = vsub.f32 %v77, %v830
  %v832 = vand.u32 %v831, 4294901760
  %833 = vmatmul.mubr.f32.gmra.mrb[0].mxu0 %v832
  %v834 = vpop.f32.mrb[0].mxu0
  %v835 = vadd.f32 %v643, %v834
  %v836 = vpop.f32.mrb[0].mxu0
  %837 = vmatprep.mubr.f32.mxu0 0.0
  %v838 = vand.u32 %v80, 4294901760
  %v839 = vsub.f32 %v80, %v838
  %v840 = vand.u32 %v839, 4294901760
  %841 = vmatmul.mubr.f32.gmra.mrb[0].mxu0 %v840
  %v842 = vpop.f32.mrb[0].mxu0
  %v843 = vadd.f32 %v650, %v842
  %v844 = vpop.f32.mrb[0].mxu0
  %845 = vmatprep.mubr.f32.mxu0 0.0
  %v846 = vand.u32 %v83, 4294901760
  %v847 = vsub.f32 %v83, %v846
  %v848 = vand.u32 %v847, 4294901760
  %849 = vmatmul.mubr.f32.gmra.mrb[0].mxu0 %v848
  %v850 = vpop.f32.mrb[0].mxu0
  %v851 = vadd.f32 %v657, %v850
  %v852 = vpop.f32.mrb[0].mxu0
  %853 = vmatprep.mubr.f32.mxu0 0.0
  %v854 = vand.u32 %v86, 4294901760
  %v855 = vsub.f32 %v86, %v854
  %v856 = vand.u32 %v855, 4294901760
  %857 = vmatmul.mubr.f32.gmra.mrb[0].mxu0 %v856
  %v858 = vpop.f32.mrb[0].mxu0
  %v859 = vadd.f32 %v664, %v858
  %v860 = vpop.f32.mrb[0].mxu0
  %861 = vdwg.mxu0
  %862 = vmatprep.subr.mxu0 0.0
  %v863 = vand.u32 %v30, 4294901760
  %v864 = vsub.f32 %v30, %v863
  %v865 = vand.u32 %v864, 4294901760
  %866 = vmatpush1.msra.mxu0 %v865
  %867 = vmatprep.subr.mxu0 0.0
  %v868 = vand.u32 %v31, 4294901760
  %v869 = vsub.f32 %v31, %v868
  %v870 = vand.u32 %v869, 4294901760
  %871 = vmatpush1.msra.mxu0 %v870
  %872 = vmatprep.subr.mxu0 0.0
  %873 = vmatpush1.msra.mxu0 0.0
  %874 = vmatprep.subr.mxu0 0.0
  %875 = vmatpush1.msra.mxu0 0.0
  %876 = vmatprep.subr.mxu0 0.0
  %877 = vmatpush1.msra.mxu0 0.0
  %878 = vmatprep.subr.mxu0 0.0
  %879 = vmatpush1.msra.mxu0 0.0
  %880 = vmatprep.subr.mxu0 0.0
  %881 = vmatpush1.msra.mxu0 0.0
  %882 = vmatprep.subr.mxu0 0.0
  %883 = vmatpush1.msra.mxu0 0.0
  %884 = vmatprep.subr.mxu0 0.0
  %885 = vmatpush1.msra.mxu0 0.0
  %886 = vmatprep.subr.mxu0 0.0
  %887 = vmatpush1.msra.mxu0 0.0
  %888 = vmatprep.subr.mxu0 0.0
  %889 = vmatpush1.msra.mxu0 0.0
  %890 = vmatprep.subr.mxu0 0.0
  %891 = vmatpush1.msra.mxu0 0.0
  %892 = vmatprep.subr.mxu0 0.0
  %893 = vmatpush1.msra.mxu0 0.0
  %894 = vmatprep.subr.mxu0 0.0
  %895 = vmatpush1.msra.mxu0 0.0
  %896 = vmatprep.subr.mxu0 0.0
  %897 = vmatpush1.msra.mxu0 0.0
  %898 = vmatprep.subr.mxu0 0.0
  %899 = vmatpush1.msra.mxu0 0.0
  %900 = vmatprep.subr.mxu0 0.0
  %901 = vmatpush1.msra.mxu0 0.0
  %902 = vmatprep.subr.mxu0 0.0
  %903 = vmatpush1.msra.mxu0 0.0
  %904 = vmatprep.subr.mxu0 0.0
  %905 = vmatpush1.msra.mxu0 0.0
  %906 = vmatprep.subr.mxu0 0.0
  %907 = vmatpush1.msra.mxu0 0.0
  %908 = vmatprep.subr.mxu0 0.0
  %909 = vmatpush1.msra.mxu0 0.0
  %910 = vmatprep.subr.mxu0 0.0
  %911 = vmatpush1.msra.mxu0 0.0
  %912 = vmatprep.subr.mxu0 0.0
  %913 = vmatpush1.msra.mxu0 0.0
  %914 = vmatprep.subr.mxu0 0.0
  %915 = vmatpush1.msra.mxu0 0.0
  %916 = vmatprep.subr.mxu0 0.0
  %917 = vmatpush1.msra.mxu0 0.0
  %918 = vmatprep.subr.mxu0 0.0
  %919 = vmatpush1.msra.mxu0 0.0
  %920 = vmatprep.subr.mxu0 0.0
  %921 = vmatpush1.msra.mxu0 0.0
  %922 = vmatprep.subr.mxu0 0.0
  %923 = vmatpush1.msra.mxu0 0.0
  %924 = vmatprep.subr.mxu0 0.0
  %925 = vmatpush1.msra.mxu0 0.0
  %926 = vmatprep.subr.mxu0 0.0
  %927 = vmatpush1.msra.mxu0 0.0
  %928 = vmatprep.subr.mxu0 0.0
  %929 = vmatpush1.msra.mxu0 0.0
  %930 = vmatprep.subr.mxu0 0.0
  %931 = vmatpush1.msra.mxu0 0.0
  %932 = vmatprep.mubr.f32.mxu0 0.0
  %v933 = vand.u32 %v41, 4294901760
  %934 = vmatmul.mubr.f32.gmra.mrb[0].mxu0 %v933
  %v935 = vpop.f32.mrb[0].mxu0
  %v936 = vadd.f32 %v739, %v935
  %v937 = vpop.f32.mrb[0].mxu0
  %938 = vmatprep.mubr.f32.mxu0 0.0
  %v939 = vand.u32 %v44, 4294901760
  %940 = vmatmul.mubr.f32.gmra.mrb[0].mxu0 %v939
  %v941 = vpop.f32.mrb[0].mxu0
  %v942 = vadd.f32 %v747, %v941
  %v943 = vpop.f32.mrb[0].mxu0
  %944 = vmatprep.mubr.f32.mxu0 0.0
  %v945 = vand.u32 %v47, 4294901760
  %946 = vmatmul.mubr.f32.gmra.mrb[0].mxu0 %v945
  %v947 = vpop.f32.mrb[0].mxu0
  %v948 = vadd.f32 %v755, %v947
  %v949 = vpop.f32.mrb[0].mxu0
  %950 = vmatprep.mubr.f32.mxu0 0.0
  %v951 = vand.u32 %v50, 4294901760
  %952 = vmatmul.mubr.f32.gmra.mrb[0].mxu0 %v951
  %v953 = vpop.f32.mrb[0].mxu0
  %v954 = vadd.f32 %v763, %v953
  %v955 = vpop.f32.mrb[0].mxu0
  %956 = vmatprep.mubr.f32.mxu0 0.0
  %v957 = vand.u32 %v53, 4294901760
  %958 = vmatmul.mubr.f32.gmra.mrb[0].mxu0 %v957
  %v959 = vpop.f32.mrb[0].mxu0
  %v960 = vadd.f32 %v771, %v959
  %v961 = vpop.f32.mrb[0].mxu0
  %962 = vmatprep.mubr.f32.mxu0 0.0
  %v963 = vand.u32 %v56, 4294901760
  %964 = vmatmul.mubr.f32.gmra.mrb[0].mxu0 %v963
  %v965 = vpop.f32.mrb[0].mxu0
  %v966 = vadd.f32 %v779, %v965
  %v967 = vpop.f32.mrb[0].mxu0
  %968 = vmatprep.mubr.f32.mxu0 0.0
  %v969 = vand.u32 %v59, 4294901760
  %970 = vmatmul.mubr.f32.gmra.mrb[0].mxu0 %v969
  %v971 = vpop.f32.mrb[0].mxu0
  %v972 = vadd.f32 %v787, %v971
  %v973 = vpop.f32.mrb[0].mxu0
  %974 = vmatprep.mubr.f32.mxu0 0.0
  %v975 = vand.u32 %v62, 4294901760
  %976 = vmatmul.mubr.f32.gmra.mrb[0].mxu0 %v975
  %v977 = vpop.f32.mrb[0].mxu0
  %v978 = vadd.f32 %v795, %v977
  %v979 = vpop.f32.mrb[0].mxu0
  %980 = vmatprep.mubr.f32.mxu0 0.0
  %v981 = vand.u32 %v65, 4294901760
  %982 = vmatmul.mubr.f32.gmra.mrb[0].mxu0 %v981
  %v983 = vpop.f32.mrb[0].mxu0
  %v984 = vadd.f32 %v803, %v983
  %v985 = vpop.f32.mrb[0].mxu0
  %986 = vmatprep.mubr.f32.mxu0 0.0
  %v987 = vand.u32 %v68, 4294901760
  %988 = vmatmul.mubr.f32.gmra.mrb[0].mxu0 %v987
  %v989 = vpop.f32.mrb[0].mxu0
  %v990 = vadd.f32 %v811, %v989
  %v991 = vpop.f32.mrb[0].mxu0
  %992 = vmatprep.mubr.f32.mxu0 0.0
  %v993 = vand.u32 %v71, 4294901760
  %994 = vmatmul.mubr.f32.gmra.mrb[0].mxu0 %v993
  %v995 = vpop.f32.mrb[0].mxu0
  %v996 = vadd.f32 %v819, %v995
  %v997 = vpop.f32.mrb[0].mxu0
  %998 = vmatprep.mubr.f32.mxu0 0.0
  %v999 = vand.u32 %v74, 4294901760
  %1000 = vmatmul.mubr.f32.gmra.mrb[0].mxu0 %v999
  %v1001 = vpop.f32.mrb[0].mxu0
  %v1002 = vadd.f32 %v827, %v1001
  %v1003 = vpop.f32.mrb[0].mxu0
  %1004 = vmatprep.mubr.f32.mxu0 0.0
  %v1005 = vand.u32 %v77, 4294901760
  %1006 = vmatmul.mubr.f32.gmra.mrb[0].mxu0 %v1005
  %v1007 = vpop.f32.mrb[0].mxu0
  %v1008 = vadd.f32 %v835, %v1007
  %v1009 = vpop.f32.mrb[0].mxu0
  %1010 = vmatprep.mubr.f32.mxu0 0.0
  %v1011 = vand.u32 %v80, 4294901760
  %1012 = vmatmul.mubr.f32.gmra.mrb[0].mxu0 %v1011
  %v1013 = vpop.f32.mrb[0].mxu0
  %v1014 = vadd.f32 %v843, %v1013
  %v1015 = vpop.f32.mrb[0].mxu0
  %1016 = vmatprep.mubr.f32.mxu0 0.0
  %v1017 = vand.u32 %v83, 4294901760
  %1018 = vmatmul.mubr.f32.gmra.mrb[0].mxu0 %v1017
  %v1019 = vpop.f32.mrb[0].mxu0
  %v1020 = vadd.f32 %v851, %v1019
  %v1021 = vpop.f32.mrb[0].mxu0
  %1022 = vmatprep.mubr.f32.mxu0 0.0
  %v1023 = vand.u32 %v86, 4294901760
  %1024 = vmatmul.mubr.f32.gmra.mrb[0].mxu0 %v1023
  %v1025 = vpop.f32.mrb[0].mxu0
  %v1026 = vadd.f32 %v859, %v1025
  %v1027 = vpop.f32.mrb[0].mxu0
  %1028 = vdwg.mxu0
  %1029 = vmatprep.subr.mxu0 0.0
  %v1030 = vand.u32 %v30, 4294901760
  %1031 = vmatpush1.msra.mxu0 %v1030
  %1032 = vmatprep.subr.mxu0 0.0
  %v1033 = vand.u32 %v31, 4294901760
  %1034 = vmatpush1.msra.mxu0 %v1033
  %1035 = vmatprep.subr.mxu0 0.0
  %1036 = vmatpush1.msra.mxu0 0.0
  %1037 = vmatprep.subr.mxu0 0.0
  %1038 = vmatpush1.msra.mxu0 0.0
  %1039 = vmatprep.subr.mxu0 0.0
  %1040 = vmatpush1.msra.mxu0 0.0
  %1041 = vmatprep.subr.mxu0 0.0
  %1042 = vmatpush1.msra.mxu0 0.0
  %1043 = vmatprep.subr.mxu0 0.0
  %1044 = vmatpush1.msra.mxu0 0.0
  %1045 = vmatprep.subr.mxu0 0.0
  %1046 = vmatpush1.msra.mxu0 0.0
  %1047 = vmatprep.subr.mxu0 0.0
  %1048 = vmatpush1.msra.mxu0 0.0
  %1049 = vmatprep.subr.mxu0 0.0
  %1050 = vmatpush1.msra.mxu0 0.0
  %1051 = vmatprep.subr.mxu0 0.0
  %1052 = vmatpush1.msra.mxu0 0.0
  %1053 = vmatprep.subr.mxu0 0.0
  %1054 = vmatpush1.msra.mxu0 0.0
  %1055 = vmatprep.subr.mxu0 0.0
  %1056 = vmatpush1.msra.mxu0 0.0
  %1057 = vmatprep.subr.mxu0 0.0
  %1058 = vmatpush1.msra.mxu0 0.0
  %1059 = vmatprep.subr.mxu0 0.0
  %1060 = vmatpush1.msra.mxu0 0.0
  %1061 = vmatprep.subr.mxu0 0.0
  %1062 = vmatpush1.msra.mxu0 0.0
  %1063 = vmatprep.subr.mxu0 0.0
  %1064 = vmatpush1.msra.mxu0 0.0
  %1065 = vmatprep.subr.mxu0 0.0
  %1066 = vmatpush1.msra.mxu0 0.0
  %1067 = vmatprep.subr.mxu0 0.0
  %1068 = vmatpush1.msra.mxu0 0.0
  %1069 = vmatprep.subr.mxu0 0.0
  %1070 = vmatpush1.msra.mxu0 0.0
  %1071 = vmatprep.subr.mxu0 0.0
  %1072 = vmatpush1.msra.mxu0 0.0
  %1073 = vmatprep.subr.mxu0 0.0
  %1074 = vmatpush1.msra.mxu0 0.0
  %1075 = vmatprep.subr.mxu0 0.0
  %1076 = vmatpush1.msra.mxu0 0.0
  %1077 = vmatprep.subr.mxu0 0.0
  %1078 = vmatpush1.msra.mxu0 0.0
  %1079 = vmatprep.subr.mxu0 0.0
  %1080 = vmatpush1.msra.mxu0 0.0
  %1081 = vmatprep.subr.mxu0 0.0
  %1082 = vmatpush1.msra.mxu0 0.0
  %1083 = vmatprep.subr.mxu0 0.0
  %1084 = vmatpush1.msra.mxu0 0.0
  %1085 = vmatprep.subr.mxu0 0.0
  %1086 = vmatpush1.msra.mxu0 0.0
  %1087 = vmatprep.subr.mxu0 0.0
  %1088 = vmatpush1.msra.mxu0 0.0
  %1089 = vmatprep.subr.mxu0 0.0
  %1090 = vmatpush1.msra.mxu0 0.0
  %1091 = vmatprep.subr.mxu0 0.0
  %1092 = vmatpush1.msra.mxu0 0.0
  %1093 = vmatprep.subr.mxu0 0.0
  %1094 = vmatpush1.msra.mxu0 0.0
  %1095 = vmatprep.mubr.f32.mxu0 0.0
  %v1096 = vand.u32 %v41, 4294901760
  %1097 = vmatmul.mubr.f32.gmra.mrb[0].mxu0 %v1096
  %v1098 = vpop.f32.mrb[0].mxu0
  %v1099 = vadd.f32 %v936, %v1098
  %v1100 = vpop.f32.mrb[0].mxu0
  %1101 = vmatprep.mubr.f32.mxu0 0.0
  %v1102 = vand.u32 %v44, 4294901760
  %1103 = vmatmul.mubr.f32.gmra.mrb[0].mxu0 %v1102
  %v1104 = vpop.f32.mrb[0].mxu0
  %v1105 = vadd.f32 %v942, %v1104
  %v1106 = vpop.f32.mrb[0].mxu0
  %1107 = vmatprep.mubr.f32.mxu0 0.0
  %v1108 = vand.u32 %v47, 4294901760
  %1109 = vmatmul.mubr.f32.gmra.mrb[0].mxu0 %v1108
  %v1110 = vpop.f32.mrb[0].mxu0
  %v1111 = vadd.f32 %v948, %v1110
  %v1112 = vpop.f32.mrb[0].mxu0
  %1113 = vmatprep.mubr.f32.mxu0 0.0
  %v1114 = vand.u32 %v50, 4294901760
  %1115 = vmatmul.mubr.f32.gmra.mrb[0].mxu0 %v1114
  %v1116 = vpop.f32.mrb[0].mxu0
  %v1117 = vadd.f32 %v954, %v1116
  %v1118 = vpop.f32.mrb[0].mxu0
  %1119 = vmatprep.mubr.f32.mxu0 0.0
  %v1120 = vand.u32 %v53, 4294901760
  %1121 = vmatmul.mubr.f32.gmra.mrb[0].mxu0 %v1120
  %v1122 = vpop.f32.mrb[0].mxu0
  %v1123 = vadd.f32 %v960, %v1122
  %v1124 = vpop.f32.mrb[0].mxu0
  %1125 = vmatprep.mubr.f32.mxu0 0.0
  %v1126 = vand.u32 %v56, 4294901760
  %1127 = vmatmul.mubr.f32.gmra.mrb[0].mxu0 %v1126
  %v1128 = vpop.f32.mrb[0].mxu0
  %v1129 = vadd.f32 %v966, %v1128
  %v1130 = vpop.f32.mrb[0].mxu0
  %1131 = vmatprep.mubr.f32.mxu0 0.0
  %v1132 = vand.u32 %v59, 4294901760
  %1133 = vmatmul.mubr.f32.gmra.mrb[0].mxu0 %v1132
  %v1134 = vpop.f32.mrb[0].mxu0
  %v1135 = vadd.f32 %v972, %v1134
  %v1136 = vpop.f32.mrb[0].mxu0
  %1137 = vmatprep.mubr.f32.mxu0 0.0
  %v1138 = vand.u32 %v62, 4294901760
  %1139 = vmatmul.mubr.f32.gmra.mrb[0].mxu0 %v1138
  %v1140 = vpop.f32.mrb[0].mxu0
  %v1141 = vadd.f32 %v978, %v1140
  %v1142 = vpop.f32.mrb[0].mxu0
  %1143 = vmatprep.mubr.f32.mxu0 0.0
  %v1144 = vand.u32 %v65, 4294901760
  %1145 = vmatmul.mubr.f32.gmra.mrb[0].mxu0 %v1144
  %v1146 = vpop.f32.mrb[0].mxu0
  %v1147 = vadd.f32 %v984, %v1146
  %v1148 = vpop.f32.mrb[0].mxu0
  %1149 = vmatprep.mubr.f32.mxu0 0.0
  %v1150 = vand.u32 %v68, 4294901760
  %1151 = vmatmul.mubr.f32.gmra.mrb[0].mxu0 %v1150
  %v1152 = vpop.f32.mrb[0].mxu0
  %v1153 = vadd.f32 %v990, %v1152
  %v1154 = vpop.f32.mrb[0].mxu0
  %1155 = vmatprep.mubr.f32.mxu0 0.0
  %v1156 = vand.u32 %v71, 4294901760
  %1157 = vmatmul.mubr.f32.gmra.mrb[0].mxu0 %v1156
  %v1158 = vpop.f32.mrb[0].mxu0
  %v1159 = vadd.f32 %v996, %v1158
  %v1160 = vpop.f32.mrb[0].mxu0
  %1161 = vmatprep.mubr.f32.mxu0 0.0
  %v1162 = vand.u32 %v74, 4294901760
  %1163 = vmatmul.mubr.f32.gmra.mrb[0].mxu0 %v1162
  %v1164 = vpop.f32.mrb[0].mxu0
  %v1165 = vadd.f32 %v1002, %v1164
  %v1166 = vpop.f32.mrb[0].mxu0
  %1167 = vmatprep.mubr.f32.mxu0 0.0
  %v1168 = vand.u32 %v77, 4294901760
  %1169 = vmatmul.mubr.f32.gmra.mrb[0].mxu0 %v1168
  %v1170 = vpop.f32.mrb[0].mxu0
  %v1171 = vadd.f32 %v1008, %v1170
  %v1172 = vpop.f32.mrb[0].mxu0
  %1173 = vmatprep.mubr.f32.mxu0 0.0
  %v1174 = vand.u32 %v80, 4294901760
  %1175 = vmatmul.mubr.f32.gmra.mrb[0].mxu0 %v1174
  %v1176 = vpop.f32.mrb[0].mxu0
  %v1177 = vadd.f32 %v1014, %v1176
  %v1178 = vpop.f32.mrb[0].mxu0
  %1179 = vmatprep.mubr.f32.mxu0 0.0
  %v1180 = vand.u32 %v83, 4294901760
  %1181 = vmatmul.mubr.f32.gmra.mrb[0].mxu0 %v1180
  %v1182 = vpop.f32.mrb[0].mxu0
  %v1183 = vadd.f32 %v1020, %v1182
  %v1184 = vpop.f32.mrb[0].mxu0
  %1185 = vmatprep.mubr.f32.mxu0 0.0
  %v1186 = vand.u32 %v86, 4294901760
  %1187 = vmatmul.mubr.f32.gmra.mrb[0].mxu0 %v1186
  %v1188 = vpop.f32.mrb[0].mxu0
  %v1189 = vadd.f32 %v1026, %v1188
  %v1190 = vpop.f32.mrb[0].mxu0
  %1191 = vdwg.mxu0
  %vm1192 = vcmp.ge.f32.partialorder %v1099, 0.0
  %vm1193 = vcmp.ge.f32.partialorder %v1105, 0.0
  %vm1194 = vcmp.ge.f32.partialorder %v1111, 0.0
  %vm1195 = vcmp.ge.f32.partialorder %v1117, 0.0
  %vm1196 = vcmp.ge.f32.partialorder %v1123, 0.0
  %vm1197 = vcmp.ge.f32.partialorder %v1129, 0.0
  %vm1198 = vcmp.ge.f32.partialorder %v1135, 0.0
  %vm1199 = vcmp.ge.f32.partialorder %v1141, 0.0
  %vm1200 = vcmp.ge.f32.partialorder %v1147, 0.0
  %vm1201 = vcmp.ge.f32.partialorder %v1153, 0.0
  %vm1202 = vcmp.ge.f32.partialorder %v1159, 0.0
  %vm1203 = vcmp.ge.f32.partialorder %v1165, 0.0
  %vm1204 = vcmp.ge.f32.partialorder %v1171, 0.0
  %vm1205 = vcmp.ge.f32.partialorder %v1177, 0.0
  %vm1206 = vcmp.ge.f32.partialorder %v1183, 0.0
  %vm1207 = vcmp.ge.f32.partialorder %v1189, 0.0
  %v1208 = vmul.f32 %v1099, 0.01
  %v1209 = vmul.f32 %v1105, 0.01
  %v1210 = vmul.f32 %v1111, 0.01
  %v1211 = vmul.f32 %v1117, 0.01
  %v1212 = vmul.f32 %v1123, 0.01
  %v1213 = vmul.f32 %v1129, 0.01
  %v1214 = vmul.f32 %v1135, 0.01
  %v1215 = vmul.f32 %v1141, 0.01
  %v1216 = vmul.f32 %v1147, 0.01
  %v1217 = vmul.f32 %v1153, 0.01
  %v1218 = vmul.f32 %v1159, 0.01
  %v1219 = vmul.f32 %v1165, 0.01
  %v1220 = vmul.f32 %v1171, 0.01
  %v1221 = vmul.f32 %v1177, 0.01
  %v1222 = vmul.f32 %v1183, 0.01
  %v1223 = vmul.f32 %v1189, 0.01
  %v1224 = vsel %vm1192, %v1099, %v1208
  %v1225 = vsel %vm1193, %v1105, %v1209
  %v1226 = vsel %vm1194, %v1111, %v1210
  %v1227 = vsel %vm1195, %v1117, %v1211
  %v1228 = vsel %vm1196, %v1123, %v1212
  %v1229 = vsel %vm1197, %v1129, %v1213
  %v1230 = vsel %vm1198, %v1135, %v1214
  %v1231 = vsel %vm1199, %v1141, %v1215
  %v1232 = vsel %vm1200, %v1147, %v1216
  %v1233 = vsel %vm1201, %v1153, %v1217
  %v1234 = vsel %vm1202, %v1159, %v1218
  %v1235 = vsel %vm1203, %v1165, %v1219
  %v1236 = vsel %vm1204, %v1171, %v1220
  %v1237 = vsel %vm1205, %v1177, %v1221
  %v1238 = vsel %vm1206, %v1183, %v1222
  %v1239 = vsel %vm1207, %v1189, %v1223
  %1240 = vst [vmem:[%s3] sm:$0xff] %v1224
  %1241 = vst [vmem:[%s3 + $0x8] sm:$0xff] %v1225
  %1242 = vst [vmem:[%s3 + $0x10] sm:$0xff] %v1226
  %1243 = vst [vmem:[%s3 + $0x18] sm:$0xff] %v1227
  %1244 = vst [vmem:[%s3 + $0x20] sm:$0xff] %v1228
  %1245 = vst [vmem:[%s3 + $0x28] sm:$0xff] %v1229
  %1246 = vst [vmem:[%s3 + $0x30] sm:$0xff] %v1230
  %1247 = vst [vmem:[%s3 + $0x38] sm:$0xff] %v1231
  %1248 = vst [vmem:[%s3 + $0x40] sm:$0xff] %v1232
  %1249 = vst [vmem:[%s3 + $0x48] sm:$0xff] %v1233
  %1250 = vst [vmem:[%s3 + $0x50] sm:$0xff] %v1234
  %1251 = vst [vmem:[%s3 + $0x58] sm:$0xff] %v1235
  %1252 = vst [vmem:[%s3 + $0x60] sm:$0xff] %v1236
  %1253 = vst [vmem:[%s3 + $0x68] sm:$0xff] %v1237
  %1254 = vst [vmem:[%s3 + $0x70] sm:$0xff] %v1238
  %1255 = vst [vmem:[%s3 + $0x78] sm:$0xff] %v1239
  // Predicated region
  $region14: #{conv_transpose2d_act.1} parent=0 // pred_check
    _
  $region15: #{conv_transpose2d_act.1} parent=0 // pred_check_branch
    %1257 = sbr.rel (0) target = $region17
  $region16: #{conv_transpose2d_act.1} parent=0 // pred_region
    _
  $region17: #{conv_transpose2d_act.1} parent=0 // pred_fallthru
    _
  // Predicated region
  $region18: #{conv_transpose2d_act.1} parent=0 // pred_check
    _
  $region19: #{conv_transpose2d_act.1} parent=0 // pred_check_branch
    %1259 = sbr.rel (0) target = $region21
  $region20: #{conv_transpose2d_act.1} parent=0 // pred_region
    _
  $region21: #{conv_transpose2d_act.1} parent=0 // pred_fallthru
    _

</llo_original>
